<compile_context>
chip_gen: v5e
topology: v5e:2x2
jax: 0.10.0
libtpu: 0.0.40
codegen_flags: <defaults>
</compile_context>

<pallas_src>
import jax
import jax.numpy as jnp
from jax import lax
from jax.experimental import pallas as pl
from jax.experimental.pallas import tpu as pltpu

EPS = 1e-5


def pool_double_conv_kernel(x_ref, w1_ref, w2_ref, b1_ref, b2_ref,
                            out_ref, y1pad_ref):
    """Fused MaxPool2d(2) + (Conv3x3+BN+ReLU) x2 for one batch element.

    x_ref    : (1, 4, Hp, Wp, Cin) f32   pooled-window positions on axis 1
    w1_ref   : (9*Cin, Cp)        bf16   conv1 im2col weights (BN scale folded)
    w2_ref   : (9*Cp, Cp)         bf16   conv2 per-tap weights (BN scale folded)
    b*_ref   : (1, Cp)            f32    folded BN shift (incl. conv bias)
    out_ref  : (1, Hp, Wp, Cp)    f32
    y1pad_ref: (Hp+2, Wp+2, Cp)   bf16   VMEM-resident intermediate (with halo)
    """
    _, Hp, Wp, Cp = out_ref.shape
    Cin = x_ref.shape[-1]
    HW = Hp * Wp

    # ---- MaxPool2d(2): the 4 window positions arrive pre-split on axis 1 ----
    pooled = jnp.maximum(jnp.maximum(x_ref[0, 0], x_ref[0, 1]),
                         jnp.maximum(x_ref[0, 2], x_ref[0, 3]))  # (Hp, Wp, Cin)

    # ---- in-kernel SAME (halo=1) zero padding for conv1 ----
    zc = jnp.zeros((Hp, 1, Cin), pooled.dtype)
    zr = jnp.zeros((1, Wp + 2, Cin), pooled.dtype)
    xpad = jnp.concatenate(
        [zr, jnp.concatenate([zc, pooled, zc], axis=1), zr], axis=0)

    # ---- conv1: single im2col matmul (M=Hp*Wp, K=9*Cin, N=Cp) on the MXU ----
    cols = [xpad[kh:kh + Hp, kw:kw + Wp, :].reshape(HW, Cin)
            for kh in range(3) for kw in range(3)]
    patch1 = jnp.concatenate(cols, axis=1).astype(jnp.bfloat16)  # (HW, 9*Cin)
    acc1 = jnp.dot(patch1, w1_ref[...], preferred_element_type=jnp.float32)
    y1 = jnp.maximum(acc1 + b1_ref[...], 0.0)                    # BN(eval)+ReLU

    # ---- stage intermediate (with halo) in VMEM as bf16; never leaves chip ----
    y1 = y1.reshape(Hp, Wp, Cp)
    zc2 = jnp.zeros((Hp, 1, Cp), jnp.float32)
    zr2 = jnp.zeros((1, Wp + 2, Cp), jnp.float32)
    y1pad_ref[...] = jnp.concatenate(
        [zr2, jnp.concatenate([zc2, y1, zc2], axis=1), zr2],
        axis=0).astype(jnp.bfloat16)

    # ---- conv2: 9 per-tap matmuls with K = Cp (lane-dense), f32 accumulate ----
    acc2 = jnp.zeros((HW, Cp), jnp.float32)
    for kh in range(3):
        for kw in range(3):
            tap = kh * 3 + kw
            patch = y1pad_ref[kh:kh + Hp, kw:kw + Wp, :].reshape(HW, Cp)
            acc2 = acc2 + jnp.dot(patch,
                                  w2_ref[tap * Cp:(tap + 1) * Cp, :],
                                  preferred_element_type=jnp.float32)

    y2 = jnp.maximum(acc2 + b2_ref[...], 0.0)                    # BN(eval)+ReLU
    out_ref[...] = y2.reshape(1, Hp, Wp, Cp).astype(out_ref.dtype)


def fold_bn(conv_bias, gamma, beta, running_mean, running_var):
    scale = gamma / jnp.sqrt(running_var + EPS)
    shift = beta + (conv_bias - running_mean) * scale
    return scale, shift


@jax.jit
def pool_and_conv(x_nchw, params):
    """Pallas PoolAndConv forward. Input/output layout: NCHW (PyTorch)."""
    (w1, b1, g1, be1, m1, v1, w2, b2, g2, be2, m2, v2) = params
    N, Cin, H, W = x_nchw.shape
    assert H % 2 == 0 and W % 2 == 0, "MaxPool2d(2) expects even H, W here"
    Hp, Wp = H // 2, W // 2
    Cout = w1.shape[0]
    Cp = ((Cout + 127) // 128) * 128          # lane-dense padded channel count

    # Fold the 2x2 pool-window split into the NCHW -> NHWC transpose we need
    # anyway: x_win[n, ph*2+pw, hp, wp, c] = x[n, c, 2*hp+ph, 2*wp+pw].
    x_win = (x_nchw.reshape(N, Cin, Hp, 2, Wp, 2)
             .transpose(0, 3, 5, 2, 4, 1)
             .reshape(N, 4, Hp, Wp, Cin)
             .astype(jnp.float32))

    # conv1 weights -> lane-dense im2col slab (9*Cin, Cp), BN scale folded, bf16.
    s1, sh1 = fold_bn(b1, g1, be1, m1, v1)
    w1_slab = jnp.transpose(w1, (2, 3, 1, 0)).reshape(9 * Cin, Cout)   # HWIO rows
    w1_slab = w1_slab * s1[None, :]
    w1_slab = jnp.pad(w1_slab, ((0, 0), (0, Cp - Cout))).astype(jnp.bfloat16)

    # conv2 weights -> per-tap slab (9*Cp, Cp), BN scale folded, bf16.
    s2, sh2 = fold_bn(b2, g2, be2, m2, v2)
    w2_hwio = jnp.transpose(w2, (2, 3, 1, 0)).reshape(9, Cout, Cout)
    w2_hwio = w2_hwio * s2[None, None, :]
    w2_slab = jnp.pad(w2_hwio, ((0, 0), (0, Cp - Cout), (0, Cp - Cout)))
    w2_slab = w2_slab.reshape(9 * Cp, Cp).astype(jnp.bfloat16)

    def pad_vec(v):
        return jnp.pad(v, (0, Cp - Cout)).reshape(1, Cp).astype(jnp.float32)

    sh1p, sh2p = pad_vec(sh1), pad_vec(sh2)

    # Explicit VMEM budget (v5e scoped default is 16 MiB); generous margin for
    # layout padding of the narrow-channel input block.
    in_block = 4 * Hp * Wp * max(Cin, 128) * 4     # lane-padded Cin estimate
    out_block = Hp * Wp * Cp * 4
    w_bytes = (w1_slab.size + w2_slab.size) * 2
    scratch = (Hp + 2) * (Wp + 2) * Cp * 2
    vmem_limit = int(min(max(4 * (in_block + out_block + w_bytes + scratch),
                             16 * 1024 * 1024),
                         64 * 1024 * 1024))

    out_padded = pl.pallas_call(
        pool_double_conv_kernel,
        out_shape=jax.ShapeDtypeStruct((N, Hp, Wp, Cp), jnp.float32),
        grid_spec=pltpu.PrefetchScalarGridSpec(
            num_scalar_prefetch=0,
            grid=(N,),
            in_specs=[
                pl.BlockSpec((1, 4, Hp, Wp, Cin), lambda n: (n, 0, 0, 0, 0)),
                pl.BlockSpec((9 * Cin, Cp), lambda n: (0, 0)),
                pl.BlockSpec((9 * Cp, Cp), lambda n: (0, 0)),
                pl.BlockSpec((1, Cp), lambda n: (0, 0)),
                pl.BlockSpec((1, Cp), lambda n: (0, 0)),
            ],
            out_specs=pl.BlockSpec((1, Hp, Wp, Cp), lambda n: (n, 0, 0, 0)),
            scratch_shapes=[
                pltpu.VMEM((Hp + 2, Wp + 2, Cp), jnp.bfloat16),
            ],
        ),
        compiler_params=pltpu.CompilerParams(
            dimension_semantics=("parallel",),
            vmem_limit_bytes=vmem_limit,
        ),
    )(x_win, w1_slab, w2_slab, sh1p, sh2p)

    # Drop channel padding (padded channels are exactly 0) and go back to NCHW.
    return jnp.transpose(out_padded[..., :Cout], (0, 3, 1, 2))


def reference_pool_and_conv(x_nchw, params):
    """Pure-JAX f32 reference matching PyTorch eval-mode PoolAndConv."""
    (w1, b1, g1, be1, m1, v1, w2, b2, g2, be2, m2, v2) = params

    x = lax.reduce_window(x_nchw, -jnp.inf, lax.max,
                          (1, 1, 2, 2), (1, 1, 2, 2), "VALID")

    def block(x, w_oihw, b, gamma, beta, mean, var):
        y = lax.conv_general_dilated(
            x, w_oihw, window_strides=(1, 1), padding=((1, 1), (1, 1)),
            dimension_numbers=("NCHW", "OIHW", "NCHW"))
        y = y + b[None, :, None, None]
        y = (y - mean[None, :, None, None]) / jnp.sqrt(var[None, :, None, None] + EPS)
        y = y * gamma[None, :, None, None] + beta[None, :, None, None]
        return jnp.maximum(y, 0.0)

    y = block(x, w1, b1, g1, be1, m1, v1)
    y = block(y, w2, b2, g2, be2, m2, v2)
    return y


def make_params(key, in_channels, out_channels):
    ks = jax.random.split(key, 12)

    def conv_bn(kws, cin, cout):
        kw, kb, kg, kbe, km, kv = kws
        w = 0.1 * jax.random.normal(kw, (cout, cin, 3, 3), jnp.float32)   # OIHW
        b = 0.1 * jax.random.normal(kb, (cout,), jnp.float32)
        gamma = 1.0 + 0.1 * jax.random.normal(kg, (cout,), jnp.float32)
        beta = 0.1 * jax.random.normal(kbe, (cout,), jnp.float32)
        mean = 0.1 * jax.random.normal(km, (cout,), jnp.float32)
        var = jax.random.uniform(kv, (cout,), jnp.float32, 0.5, 1.5)
        return w, b, gamma, beta, mean, var

    p1 = conv_bn(ks[:6], in_channels, out_channels)
    p2 = conv_bn(ks[6:], out_channels, out_channels)
    return (*p1, *p2)


if __name__ == "__main__":
    N, C_IN, C_OUT, H, W = 2, 4, 8, 16, 16

    key = jax.random.PRNGKey(0)
    kx, kp = jax.random.split(key)
    x = jax.random.normal(kx, (N, C_IN, H, W), jnp.float32)   # NCHW, like PyTorch
    params = make_params(kp, C_IN, C_OUT)

    out = jax.block_until_ready(pool_and_conv(x, params))
    ref = jax.block_until_ready(reference_pool_and_conv(x, params))

    assert out.shape == (N, C_OUT, H // 2, W // 2), out.shape
    # bf16 MXU matmuls (f32 accumulation, BN scale folded into bf16 weights)
    # vs f32 reference -> loosened tolerance.
    assert jnp.allclose(out, ref, atol=5e-2, rtol=5e-2), float(
        jnp.max(jnp.abs(out - ref)))

    print("KERNEL_OK")
</pallas_src>

<mosaic_0001>
module attributes {stable_mosaic.version = 11 : i64} {
  func.func @pool_double_conv_kernel(%arg0: i32, %arg1: memref<1x4x8x8x4xf32, #tpu.memory_space<vmem>>, %arg2: memref<36x128xbf16, #tpu.memory_space<vmem>>, %arg3: memref<1152x128xbf16, #tpu.memory_space<vmem>>, %arg4: memref<1x128xf32, #tpu.memory_space<vmem>>, %arg5: memref<1x128xf32, #tpu.memory_space<vmem>>, %arg6: memref<1x8x8x128xf32, #tpu.memory_space<vmem>>, %arg7: memref<10x10x128xbf16, #tpu.memory_space<vmem>>) attributes {dimension_semantics = [#tpu.dimension_semantics<parallel>], iteration_bounds = array<i64: 2>, scalar_prefetch = 0 : i64, scratch_operands = 1 : i64, tpu.core_type = #tpu.core_type<tc>, window_params = [{transform_indices = @transform_0, window_bounds = array<i64: 1, 4, 8, 8, 4>}, {pipeline_mode = #tpu.pipeline_mode<synchronous>, transform_indices = @transform_1, window_bounds = array<i64: 36, 128>}, {pipeline_mode = #tpu.pipeline_mode<synchronous>, transform_indices = @transform_2, window_bounds = array<i64: 1152, 128>}, {pipeline_mode = #tpu.pipeline_mode<synchronous>, transform_indices = @transform_3, window_bounds = array<i64: 1, 128>}, {pipeline_mode = #tpu.pipeline_mode<synchronous>, transform_indices = @transform_4, window_bounds = array<i64: 1, 128>}, {transform_indices = @transform_5, window_bounds = array<i64: 1, 8, 8, 128>}]} {
    %c0 = arith.constant 0 : index
    %c0_0 = arith.constant 0 : index
    %c0_1 = arith.constant 0 : index
    %c0_2 = arith.constant 0 : index
    %c0_3 = arith.constant 0 : index
    %0 = vector.load %arg1[%c0, %c0_0, %c0_1, %c0_2, %c0_3] : memref<1x4x8x8x4xf32, #tpu.memory_space<vmem>>, vector<1x1x8x8x4xf32>
    %1 = vector.shape_cast %0 : vector<1x1x8x8x4xf32> to vector<8x8x4xf32>
    %c0_4 = arith.constant 0 : index
    %c1 = arith.constant 1 : index
    %c0_5 = arith.constant 0 : index
    %c0_6 = arith.constant 0 : index
    %c0_7 = arith.constant 0 : index
    %2 = vector.load %arg1[%c0_4, %c1, %c0_5, %c0_6, %c0_7] : memref<1x4x8x8x4xf32, #tpu.memory_space<vmem>>, vector<1x1x8x8x4xf32>
    %3 = vector.shape_cast %2 : vector<1x1x8x8x4xf32> to vector<8x8x4xf32>
    %4 = arith.maximumf %1, %3 : vector<8x8x4xf32>
    %c0_8 = arith.constant 0 : index
    %c2 = arith.constant 2 : index
    %c0_9 = arith.constant 0 : index
    %c0_10 = arith.constant 0 : index
    %c0_11 = arith.constant 0 : index
    %5 = vector.load %arg1[%c0_8, %c2, %c0_9, %c0_10, %c0_11] : memref<1x4x8x8x4xf32, #tpu.memory_space<vmem>>, vector<1x1x8x8x4xf32>
    %6 = vector.shape_cast %5 : vector<1x1x8x8x4xf32> to vector<8x8x4xf32>
    %c0_12 = arith.constant 0 : index
    %c3 = arith.constant 3 : index
    %c0_13 = arith.constant 0 : index
    %c0_14 = arith.constant 0 : index
    %c0_15 = arith.constant 0 : index
    %7 = vector.load %arg1[%c0_12, %c3, %c0_13, %c0_14, %c0_15] : memref<1x4x8x8x4xf32, #tpu.memory_space<vmem>>, vector<1x1x8x8x4xf32>
    %8 = vector.shape_cast %7 : vector<1x1x8x8x4xf32> to vector<8x8x4xf32>
    %9 = arith.maximumf %6, %8 : vector<8x8x4xf32>
    %10 = arith.maximumf %4, %9 : vector<8x8x4xf32>
    %cst = arith.constant 0.000000e+00 : f32
    %11 = vector.broadcast %cst : f32 to vector<8x1x4xf32>
    %cst_16 = arith.constant 0.000000e+00 : f32
    %12 = vector.broadcast %cst_16 : f32 to vector<1x10x4xf32>
    %13 = tpu.concatenate %11, %10, %11 in 1 : vector<8x1x4xf32>, vector<8x8x4xf32>, vector<8x1x4xf32> -> vector<8x10x4xf32>
    %14 = tpu.concatenate %12, %13, %12 in 0 : vector<1x10x4xf32>, vector<8x10x4xf32>, vector<1x10x4xf32> -> vector<10x10x4xf32>
    %15 = vector.extract_strided_slice %14 {offsets = [0, 0, 0], sizes = [8, 8, 4], strides = [1, 1, 1]} : vector<10x10x4xf32> to vector<8x8x4xf32>
    %16 = vector.shape_cast %15 : vector<8x8x4xf32> to vector<64x4xf32>
    %17 = vector.extract_strided_slice %14 {offsets = [0, 1, 0], sizes = [8, 8, 4], strides = [1, 1, 1]} : vector<10x10x4xf32> to vector<8x8x4xf32>
    %18 = vector.shape_cast %17 : vector<8x8x4xf32> to vector<64x4xf32>
    %19 = vector.extract_strided_slice %14 {offsets = [0, 2, 0], sizes = [8, 8, 4], strides = [1, 1, 1]} : vector<10x10x4xf32> to vector<8x8x4xf32>
    %20 = vector.shape_cast %19 : vector<8x8x4xf32> to vector<64x4xf32>
    %21 = vector.extract_strided_slice %14 {offsets = [1, 0, 0], sizes = [8, 8, 4], strides = [1, 1, 1]} : vector<10x10x4xf32> to vector<8x8x4xf32>
    %22 = vector.shape_cast %21 : vector<8x8x4xf32> to vector<64x4xf32>
    %23 = vector.extract_strided_slice %14 {offsets = [1, 1, 0], sizes = [8, 8, 4], strides = [1, 1, 1]} : vector<10x10x4xf32> to vector<8x8x4xf32>
    %24 = vector.shape_cast %23 : vector<8x8x4xf32> to vector<64x4xf32>
    %25 = vector.extract_strided_slice %14 {offsets = [1, 2, 0], sizes = [8, 8, 4], strides = [1, 1, 1]} : vector<10x10x4xf32> to vector<8x8x4xf32>
    %26 = vector.shape_cast %25 : vector<8x8x4xf32> to vector<64x4xf32>
    %27 = vector.extract_strided_slice %14 {offsets = [2, 0, 0], sizes = [8, 8, 4], strides = [1, 1, 1]} : vector<10x10x4xf32> to vector<8x8x4xf32>
    %28 = vector.shape_cast %27 : vector<8x8x4xf32> to vector<64x4xf32>
    %29 = vector.extract_strided_slice %14 {offsets = [2, 1, 0], sizes = [8, 8, 4], strides = [1, 1, 1]} : vector<10x10x4xf32> to vector<8x8x4xf32>
    %30 = vector.shape_cast %29 : vector<8x8x4xf32> to vector<64x4xf32>
    %31 = vector.extract_strided_slice %14 {offsets = [2, 2, 0], sizes = [8, 8, 4], strides = [1, 1, 1]} : vector<10x10x4xf32> to vector<8x8x4xf32>
    %32 = vector.shape_cast %31 : vector<8x8x4xf32> to vector<64x4xf32>
    %33 = tpu.concatenate %16, %18, %20, %22, %24, %26, %28, %30, %32 in 1 : vector<64x4xf32>, vector<64x4xf32>, vector<64x4xf32>, vector<64x4xf32>, vector<64x4xf32>, vector<64x4xf32>, vector<64x4xf32>, vector<64x4xf32>, vector<64x4xf32> -> vector<64x36xf32>
    %34 = arith.truncf %33 : vector<64x36xf32> to vector<64x36xbf16>
    %c0_17 = arith.constant 0 : index
    %c0_18 = arith.constant 0 : index
    %35 = vector.load %arg2[%c0_17, %c0_18] : memref<36x128xbf16, #tpu.memory_space<vmem>>, vector<36x128xbf16>
    %cst_19 = arith.constant dense<0.000000e+00> : vector<64x128xf32>
    %36 = tpu.matmul %34, %35, %cst_19 {dimension_numbers = #tpu.dot_dimension_numbers<[1], [0], [0], [1], [0, 0, 1, 1], [], []>} : vector<64x36xbf16>, vector<36x128xbf16>, vector<64x128xf32> -> vector<64x128xf32>
    %c0_20 = arith.constant 0 : index
    %c0_21 = arith.constant 0 : index
    %37 = vector.load %arg4[%c0_20, %c0_21] : memref<1x128xf32, #tpu.memory_space<vmem>>, vector<1x128xf32>
    %38 = vector.broadcast %37 : vector<1x128xf32> to vector<64x128xf32>
    %39 = arith.addf %36, %38 : vector<64x128xf32>
    %cst_22 = arith.constant 0.000000e+00 : f32
    %40 = vector.broadcast %cst_22 : f32 to vector<64x128xf32>
    %41 = arith.maximumf %39, %40 : vector<64x128xf32>
    %42 = vector.shape_cast %41 : vector<64x128xf32> to vector<8x8x128xf32>
    %cst_23 = arith.constant 0.000000e+00 : f32
    %43 = vector.broadcast %cst_23 : f32 to vector<8x1x128xf32>
    %cst_24 = arith.constant 0.000000e+00 : f32
    %44 = vector.broadcast %cst_24 : f32 to vector<1x10x128xf32>
    %45 = tpu.concatenate %43, %42, %43 in 1 : vector<8x1x128xf32>, vector<8x8x128xf32>, vector<8x1x128xf32> -> vector<8x10x128xf32>
    %46 = tpu.concatenate %44, %45, %44 in 0 : vector<1x10x128xf32>, vector<8x10x128xf32>, vector<1x10x128xf32> -> vector<10x10x128xf32>
    %47 = arith.truncf %46 : vector<10x10x128xf32> to vector<10x10x128xbf16>
    %c0_25 = arith.constant 0 : index
    %c0_26 = arith.constant 0 : index
    %c0_27 = arith.constant 0 : index
    %48 = vector.load %arg7[%c0_25, %c0_26, %c0_27] : memref<10x10x128xbf16, #tpu.memory_space<vmem>>, vector<10x10x128xbf16>
    tpu.vector_store %arg7[%c0_25, %c0_26, %c0_27], %47 {strides = array<i32>} : memref<10x10x128xbf16, #tpu.memory_space<vmem>>, vector<10x10x128xbf16>,
    %cst_28 = arith.constant 0.000000e+00 : f32
    %49 = vector.broadcast %cst_28 : f32 to vector<64x128xf32>
    %c0_29 = arith.constant 0 : index
    %c0_30 = arith.constant 0 : index
    %c0_31 = arith.constant 0 : index
    %50 = vector.load %arg7[%c0_29, %c0_30, %c0_31] : memref<10x10x128xbf16, #tpu.memory_space<vmem>>, vector<8x8x128xbf16>
    %51 = vector.shape_cast %50 : vector<8x8x128xbf16> to vector<64x128xbf16>
    %c0_32 = arith.constant 0 : index
    %c0_33 = arith.constant 0 : index
    %52 = vector.load %arg3[%c0_32, %c0_33] : memref<1152x128xbf16, #tpu.memory_space<vmem>>, vector<128x128xbf16>
    %cst_34 = arith.constant dense<0.000000e+00> : vector<64x128xf32>
    %53 = tpu.matmul %51, %52, %cst_34 {dimension_numbers = #tpu.dot_dimension_numbers<[1], [0], [0], [1], [0, 0, 1, 1], [], []>} : vector<64x128xbf16>, vector<128x128xbf16>, vector<64x128xf32> -> vector<64x128xf32>
    %54 = arith.addf %49, %53 : vector<64x128xf32>
    %c0_35 = arith.constant 0 : index
    %c1_36 = arith.constant 1 : index
    %c0_37 = arith.constant 0 : index
    %55 = vector.load %arg7[%c0_35, %c1_36, %c0_37] : memref<10x10x128xbf16, #tpu.memory_space<vmem>>, vector<8x8x128xbf16>
    %56 = vector.shape_cast %55 : vector<8x8x128xbf16> to vector<64x128xbf16>
    %c128 = arith.constant 128 : index
    %c0_38 = arith.constant 0 : index
    %57 = vector.load %arg3[%c128, %c0_38] : memref<1152x128xbf16, #tpu.memory_space<vmem>>, vector<128x128xbf16>
    %cst_39 = arith.constant dense<0.000000e+00> : vector<64x128xf32>
    %58 = tpu.matmul %56, %57, %cst_39 {dimension_numbers = #tpu.dot_dimension_numbers<[1], [0], [0], [1], [0, 0, 1, 1], [], []>} : vector<64x128xbf16>, vector<128x128xbf16>, vector<64x128xf32> -> vector<64x128xf32>
    %59 = arith.addf %54, %58 : vector<64x128xf32>
    %c0_40 = arith.constant 0 : index
    %c2_41 = arith.constant 2 : index
    %c0_42 = arith.constant 0 : index
    %60 = vector.load %arg7[%c0_40, %c2_41, %c0_42] : memref<10x10x128xbf16, #tpu.memory_space<vmem>>, vector<8x8x128xbf16>
    %61 = vector.shape_cast %60 : vector<8x8x128xbf16> to vector<64x128xbf16>
    %c256 = arith.constant 256 : index
    %c0_43 = arith.constant 0 : index
    %62 = vector.load %arg3[%c256, %c0_43] : memref<1152x128xbf16, #tpu.memory_space<vmem>>, vector<128x128xbf16>
    %cst_44 = arith.constant dense<0.000000e+00> : vector<64x128xf32>
    %63 = tpu.matmul %61, %62, %cst_44 {dimension_numbers = #tpu.dot_dimension_numbers<[1], [0], [0], [1], [0, 0, 1, 1], [], []>} : vector<64x128xbf16>, vector<128x128xbf16>, vector<64x128xf32> -> vector<64x128xf32>
    %64 = arith.addf %59, %63 : vector<64x128xf32>
    %c1_45 = arith.constant 1 : index
    %c0_46 = arith.constant 0 : index
    %c0_47 = arith.constant 0 : index
    %65 = vector.load %arg7[%c1_45, %c0_46, %c0_47] : memref<10x10x128xbf16, #tpu.memory_space<vmem>>, vector<8x8x128xbf16>
    %66 = vector.shape_cast %65 : vector<8x8x128xbf16> to vector<64x128xbf16>
    %c384 = arith.constant 384 : index
    %c0_48 = arith.constant 0 : index
    %67 = vector.load %arg3[%c384, %c0_48] : memref<1152x128xbf16, #tpu.memory_space<vmem>>, vector<128x128xbf16>
    %cst_49 = arith.constant dense<0.000000e+00> : vector<64x128xf32>
    %68 = tpu.matmul %66, %67, %cst_49 {dimension_numbers = #tpu.dot_dimension_numbers<[1], [0], [0], [1], [0, 0, 1, 1], [], []>} : vector<64x128xbf16>, vector<128x128xbf16>, vector<64x128xf32> -> vector<64x128xf32>
    %69 = arith.addf %64, %68 : vector<64x128xf32>
    %c1_50 = arith.constant 1 : index
    %c1_51 = arith.constant 1 : index
    %c0_52 = arith.constant 0 : index
    %70 = vector.load %arg7[%c1_50, %c1_51, %c0_52] : memref<10x10x128xbf16, #tpu.memory_space<vmem>>, vector<8x8x128xbf16>
    %71 = vector.shape_cast %70 : vector<8x8x128xbf16> to vector<64x128xbf16>
    %c512 = arith.constant 512 : index
    %c0_53 = arith.constant 0 : index
    %72 = vector.load %arg3[%c512, %c0_53] : memref<1152x128xbf16, #tpu.memory_space<vmem>>, vector<128x128xbf16>
    %cst_54 = arith.constant dense<0.000000e+00> : vector<64x128xf32>
    %73 = tpu.matmul %71, %72, %cst_54 {dimension_numbers = #tpu.dot_dimension_numbers<[1], [0], [0], [1], [0, 0, 1, 1], [], []>} : vector<64x128xbf16>, vector<128x128xbf16>, vector<64x128xf32> -> vector<64x128xf32>
    %74 = arith.addf %69, %73 : vector<64x128xf32>
    %c1_55 = arith.constant 1 : index
    %c2_56 = arith.constant 2 : index
    %c0_57 = arith.constant 0 : index
    %75 = vector.load %arg7[%c1_55, %c2_56, %c0_57] : memref<10x10x128xbf16, #tpu.memory_space<vmem>>, vector<8x8x128xbf16>
    %76 = vector.shape_cast %75 : vector<8x8x128xbf16> to vector<64x128xbf16>
    %c640 = arith.constant 640 : index
    %c0_58 = arith.constant 0 : index
    %77 = vector.load %arg3[%c640, %c0_58] : memref<1152x128xbf16, #tpu.memory_space<vmem>>, vector<128x128xbf16>
    %cst_59 = arith.constant dense<0.000000e+00> : vector<64x128xf32>
    %78 = tpu.matmul %76, %77, %cst_59 {dimension_numbers = #tpu.dot_dimension_numbers<[1], [0], [0], [1], [0, 0, 1, 1], [], []>} : vector<64x128xbf16>, vector<128x128xbf16>, vector<64x128xf32> -> vector<64x128xf32>
    %79 = arith.addf %74, %78 : vector<64x128xf32>
    %c2_60 = arith.constant 2 : index
    %c0_61 = arith.constant 0 : index
    %c0_62 = arith.constant 0 : index
    %80 = vector.load %arg7[%c2_60, %c0_61, %c0_62] : memref<10x10x128xbf16, #tpu.memory_space<vmem>>, vector<8x8x128xbf16>
    %81 = vector.shape_cast %80 : vector<8x8x128xbf16> to vector<64x128xbf16>
    %c768 = arith.constant 768 : index
    %c0_63 = arith.constant 0 : index
    %82 = vector.load %arg3[%c768, %c0_63] : memref<1152x128xbf16, #tpu.memory_space<vmem>>, vector<128x128xbf16>
    %cst_64 = arith.constant dense<0.000000e+00> : vector<64x128xf32>
    %83 = tpu.matmul %81, %82, %cst_64 {dimension_numbers = #tpu.dot_dimension_numbers<[1], [0], [0], [1], [0, 0, 1, 1], [], []>} : vector<64x128xbf16>, vector<128x128xbf16>, vector<64x128xf32> -> vector<64x128xf32>
    %84 = arith.addf %79, %83 : vector<64x128xf32>
    %c2_65 = arith.constant 2 : index
    %c1_66 = arith.constant 1 : index
    %c0_67 = arith.constant 0 : index
    %85 = vector.load %arg7[%c2_65, %c1_66, %c0_67] : memref<10x10x128xbf16, #tpu.memory_space<vmem>>, vector<8x8x128xbf16>
    %86 = vector.shape_cast %85 : vector<8x8x128xbf16> to vector<64x128xbf16>
    %c896 = arith.constant 896 : index
    %c0_68 = arith.constant 0 : index
    %87 = vector.load %arg3[%c896, %c0_68] : memref<1152x128xbf16, #tpu.memory_space<vmem>>, vector<128x128xbf16>
    %cst_69 = arith.constant dense<0.000000e+00> : vector<64x128xf32>
    %88 = tpu.matmul %86, %87, %cst_69 {dimension_numbers = #tpu.dot_dimension_numbers<[1], [0], [0], [1], [0, 0, 1, 1], [], []>} : vector<64x128xbf16>, vector<128x128xbf16>, vector<64x128xf32> -> vector<64x128xf32>
    %89 = arith.addf %84, %88 : vector<64x128xf32>
    %c2_70 = arith.constant 2 : index
    %c2_71 = arith.constant 2 : index
    %c0_72 = arith.constant 0 : index
    %90 = vector.load %arg7[%c2_70, %c2_71, %c0_72] : memref<10x10x128xbf16, #tpu.memory_space<vmem>>, vector<8x8x128xbf16>
    %91 = vector.shape_cast %90 : vector<8x8x128xbf16> to vector<64x128xbf16>
    %c1024 = arith.constant 1024 : index
    %c0_73 = arith.constant 0 : index
    %92 = vector.load %arg3[%c1024, %c0_73] : memref<1152x128xbf16, #tpu.memory_space<vmem>>, vector<128x128xbf16>
    %cst_74 = arith.constant dense<0.000000e+00> : vector<64x128xf32>
    %93 = tpu.matmul %91, %92, %cst_74 {dimension_numbers = #tpu.dot_dimension_numbers<[1], [0], [0], [1], [0, 0, 1, 1], [], []>} : vector<64x128xbf16>, vector<128x128xbf16>, vector<64x128xf32> -> vector<64x128xf32>
    %94 = arith.addf %89, %93 : vector<64x128xf32>
    %c0_75 = arith.constant 0 : index
    %c0_76 = arith.constant 0 : index
    %95 = vector.load %arg5[%c0_75, %c0_76] : memref<1x128xf32, #tpu.memory_space<vmem>>, vector<1x128xf32>
    %96 = vector.broadcast %95 : vector<1x128xf32> to vector<64x128xf32>
    %97 = arith.addf %94, %96 : vector<64x128xf32>
    %cst_77 = arith.constant 0.000000e+00 : f32
    %98 = vector.broadcast %cst_77 : f32 to vector<64x128xf32>
    %99 = arith.maximumf %97, %98 : vector<64x128xf32>
    %100 = vector.shape_cast %99 : vector<64x128xf32> to vector<1x8x8x128xf32>
    %c0_78 = arith.constant 0 : index
    %c0_79 = arith.constant 0 : index
    %c0_80 = arith.constant 0 : index
    %c0_81 = arith.constant 0 : index
    %101 = vector.load %arg6[%c0_78, %c0_79, %c0_80, %c0_81] : memref<1x8x8x128xf32, #tpu.memory_space<vmem>>, vector<1x8x8x128xf32>
    tpu.vector_store %arg6[%c0_78, %c0_79, %c0_80, %c0_81], %100 {strides = array<i32>} : memref<1x8x8x128xf32, #tpu.memory_space<vmem>>, vector<1x8x8x128xf32>,
    return
  }
  func.func @transform_0(%arg0: i32) -> (i32, i32, i32, i32, i32) {
    %c0_i32 = arith.constant 0 : i32
    %c0_i32_0 = arith.constant 0 : i32
    %c0_i32_1 = arith.constant 0 : i32
    %c0_i32_2 = arith.constant 0 : i32
    %c0_i32_3 = arith.constant 0 : i32
    return %arg0, %c0_i32, %c0_i32_0, %c0_i32_1, %c0_i32_2 : i32, i32, i32, i32, i32
  }
  func.func @transform_1(%arg0: i32) -> (i32, i32) {
    %c0_i32 = arith.constant 0 : i32
    %c0_i32_0 = arith.constant 0 : i32
    %c0_i32_1 = arith.constant 0 : i32
    return %c0_i32, %c0_i32_0 : i32, i32
  }
  func.func @transform_2(%arg0: i32) -> (i32, i32) {
    %c0_i32 = arith.constant 0 : i32
    %c0_i32_0 = arith.constant 0 : i32
    %c0_i32_1 = arith.constant 0 : i32
    return %c0_i32, %c0_i32_0 : i32, i32
  }
  func.func @transform_3(%arg0: i32) -> (i32, i32) {
    %c0_i32 = arith.constant 0 : i32
    %c0_i32_0 = arith.constant 0 : i32
    %c0_i32_1 = arith.constant 0 : i32
    return %c0_i32, %c0_i32_0 : i32, i32
  }
  func.func @transform_4(%arg0: i32) -> (i32, i32) {
    %c0_i32 = arith.constant 0 : i32
    %c0_i32_0 = arith.constant 0 : i32
    %c0_i32_1 = arith.constant 0 : i32
    return %c0_i32, %c0_i32_0 : i32, i32
  }
  func.func @transform_5(%arg0: i32) -> (i32, i32, i32, i32) {
    %c0_i32 = arith.constant 0 : i32
    %c0_i32_0 = arith.constant 0 : i32
    %c0_i32_1 = arith.constant 0 : i32
    %c0_i32_2 = arith.constant 0 : i32
    return %arg0, %c0_i32, %c0_i32_0, %c0_i32_1 : i32, i32, i32, i32
  }
}

</mosaic_0001>

<llo_original>
// kernel: pool_and_conv.1
$region0: #{pool_and_conv.1}
  #allocation0 [shape = 'u32[]', space=smem, size = 0x4, offset = 0x4, fixed_abs, tag = 'smem constant byte address 0x4 - core index']
  #allocation1 [shape = 'u32[72,128]{1,0:T(1,128)}', space=vmem, size = 0x9000, scoped, tag = 'internal scratch']
  #allocation2 [shape = 'bf16[10,10,128]{2,1,0:T(8,128)(2,1)}', space=vmem, size = 0xa000, scoped, tag = 'scratch operand']
  %s0 = inlined_call_operand.vmem [shape: f32[2,4,8,8,4], index: 0, kind: input, shape index: {}]
  %s1 = inlined_call_operand.vmem [shape: bf16[36,128], index: 1, kind: input, shape index: {}]
  %s2 = inlined_call_operand.vmem [shape: bf16[1152,128], index: 2, kind: input, shape index: {}]
  %s3 = inlined_call_operand.vmem [shape: f32[1,128], index: 3, kind: input, shape index: {}]
  %s4 = inlined_call_operand.vmem [shape: f32[1,128], index: 4, kind: input, shape index: {}]
  %s5 = inlined_call_operand.vmem [shape: f32[2,8,8,128], index: 5, kind: output, shape index: {}]
  %s6 = sld [smem:[#allocation0]]
  $region53: #{pool_and_conv.1} parent=0
    _
  %s8 = ssub.s32 1, %s6
  %s9 = scalar_select 0, %s8, %s6
  loop: start=0, step=1, limit=4
  $region2: #{pool_and_conv.1} parent=0 // loop_pre_header
    _
  $region3: #{pool_and_conv.1} parent=0 // loop_header
    %s11 = sphi 0, %s15
    %p12 = scmp.ge.s32.totalorder %s11, 4
    %s21 = sphi 0, %s23
    %s24 = sphi 0, %s21
    %s25 = sphi 0, %s24
    %s41 = sphi 0, %s25
    %s45 = sphi 0, %s45
    %s47 = sphi 0, %s45
    %s48 = sphi 0, %s47
    %s62 = sphi 0, %s48
    %s66 = sphi 0, %s66
    %s68 = sphi 0, %s66
    %s69 = sphi 0, %s68
    %s83 = sphi 0, %s69
    %s87 = sphi 0, %s87
    %s89 = sphi 0, %s87
    %s90 = sphi 0, %s89
    %s104 = sphi 0, %s90
    %s108 = sphi 0, %s108
    %s110 = sphi 0, %s108
    %s111 = sphi 0, %s110
    %s125 = sphi 0, %s111
    %s131 = sphi 0, %s133
    %s134 = sphi 0, %s131
    %s135 = sphi 0, %s134
    %s151 = sphi 0, %s135
  $region4: #{pool_and_conv.1} parent=0 // loop_header_branch
    %14 = sbr.rel (%p12) target = $region8
  $region5: #{pool_and_conv.1} parent=0 // loop_body
    %s16 = ssub.s32 %s11, 1
    %s17 = ssub.s32 %s11, 2
    %s18 = sadd.s32 %s11, 1
    %s19 = ssub.s32 %s11, %s18
    %p20 = scmp.eq.s32.totalorder %s19, 0
    %s22 = sadd.s32 %s21, 1
    %s23 = scalar_select %p20, %s21, %s22
    %p26 = pneg %p20
    %p27 = scmp.eq.s32.totalorder %s11, 1
    %p28 = por %p26, %p27
    %p29 = scmp.ne.s32.totalorder %s21, %s24
    %p30 = scmp.eq.s32.totalorder %s11, 0
    %p31 = por %p29, %p30
    %p32 = scmp.ne.s32.totalorder %s21, %s24
    %p33 = scmp.eq.s32.totalorder %s16, 1
    %p34 = por %p32, %p33
    %p35 = scmp.ne.s32.totalorder %s24, %s25
    %p36 = scmp.eq.s32.totalorder %s16, 0
    %p37 = por %p35, %p36
    %p38 = scmp.ne.s32.totalorder %s24, %s25
    %p39 = scmp.eq.s32.totalorder %s17, 1
    %p40 = por %p38, %p39
    %p42 = scmp.ne.s32.totalorder %s25, %s41
    %p43 = scmp.eq.s32.totalorder %s17, 0
    %p44 = por %p42, %p43
    %s46 = sadd.s32 %s45, 1
    %p49 = scmp.eq.s32.totalorder %s11, 1
    %p50 = scmp.ne.s32.totalorder %s45, %s47
    %p51 = scmp.eq.s32.totalorder %s11, 0
    %p52 = por %p50, %p51
    %p53 = scmp.ne.s32.totalorder %s45, %s47
    %p54 = scmp.eq.s32.totalorder %s16, 1
    %p55 = por %p53, %p54
    %p56 = scmp.ne.s32.totalorder %s47, %s48
    %p57 = scmp.eq.s32.totalorder %s16, 0
    %p58 = por %p56, %p57
    %p59 = scmp.ne.s32.totalorder %s47, %s48
    %p60 = scmp.eq.s32.totalorder %s17, 1
    %p61 = por %p59, %p60
    %p63 = scmp.ne.s32.totalorder %s48, %s62
    %p64 = scmp.eq.s32.totalorder %s17, 0
    %p65 = por %p63, %p64
    %s67 = sadd.s32 %s66, 1
    %p70 = scmp.eq.s32.totalorder %s11, 1
    %p71 = scmp.ne.s32.totalorder %s66, %s68
    %p72 = scmp.eq.s32.totalorder %s11, 0
    %p73 = por %p71, %p72
    %p74 = scmp.ne.s32.totalorder %s66, %s68
    %p75 = scmp.eq.s32.totalorder %s16, 1
    %p76 = por %p74, %p75
    %p77 = scmp.ne.s32.totalorder %s68, %s69
    %p78 = scmp.eq.s32.totalorder %s16, 0
    %p79 = por %p77, %p78
    %p80 = scmp.ne.s32.totalorder %s68, %s69
    %p81 = scmp.eq.s32.totalorder %s17, 1
    %p82 = por %p80, %p81
    %p84 = scmp.ne.s32.totalorder %s69, %s83
    %p85 = scmp.eq.s32.totalorder %s17, 0
    %p86 = por %p84, %p85
    %s88 = sadd.s32 %s87, 1
    %p91 = scmp.eq.s32.totalorder %s11, 1
    %p92 = scmp.ne.s32.totalorder %s87, %s89
    %p93 = scmp.eq.s32.totalorder %s11, 0
    %p94 = por %p92, %p93
    %p95 = scmp.ne.s32.totalorder %s87, %s89
    %p96 = scmp.eq.s32.totalorder %s16, 1
    %p97 = por %p95, %p96
    %p98 = scmp.ne.s32.totalorder %s89, %s90
    %p99 = scmp.eq.s32.totalorder %s16, 0
    %p100 = por %p98, %p99
    %p101 = scmp.ne.s32.totalorder %s89, %s90
    %p102 = scmp.eq.s32.totalorder %s17, 1
    %p103 = por %p101, %p102
    %p105 = scmp.ne.s32.totalorder %s90, %s104
    %p106 = scmp.eq.s32.totalorder %s17, 0
    %p107 = por %p105, %p106
    %s109 = sadd.s32 %s108, 1
    %p112 = scmp.eq.s32.totalorder %s11, 1
    %p113 = scmp.ne.s32.totalorder %s108, %s110
    %p114 = scmp.eq.s32.totalorder %s11, 0
    %p115 = por %p113, %p114
    %p116 = scmp.ne.s32.totalorder %s108, %s110
    %p117 = scmp.eq.s32.totalorder %s16, 1
    %p118 = por %p116, %p117
    %p119 = scmp.ne.s32.totalorder %s110, %s111
    %p120 = scmp.eq.s32.totalorder %s16, 0
    %p121 = por %p119, %p120
    %p122 = scmp.ne.s32.totalorder %s110, %s111
    %p123 = scmp.eq.s32.totalorder %s17, 1
    %p124 = por %p122, %p123
    %p126 = scmp.ne.s32.totalorder %s111, %s125
    %p127 = scmp.eq.s32.totalorder %s17, 0
    %p128 = por %p126, %p127
    %s129 = ssub.s32 %s11, %s18
    %p130 = scmp.eq.s32.totalorder %s129, 0
    %s132 = sadd.s32 %s131, 1
    %s133 = scalar_select %p130, %s131, %s132
    %p136 = pneg %p130
    %p137 = scmp.eq.s32.totalorder %s11, 1
    %p138 = por %p136, %p137
    %p139 = scmp.ne.s32.totalorder %s131, %s134
    %p140 = scmp.eq.s32.totalorder %s11, 0
    %p141 = por %p139, %p140
    %p142 = scmp.ne.s32.totalorder %s131, %s134
    %p143 = scmp.eq.s32.totalorder %s16, 1
    %p144 = por %p142, %p143
    %p145 = scmp.ne.s32.totalorder %s134, %s135
    %p146 = scmp.eq.s32.totalorder %s16, 0
    %p147 = por %p145, %p146
    %p148 = scmp.ne.s32.totalorder %s134, %s135
    %p149 = scmp.eq.s32.totalorder %s17, 1
    %p150 = por %p148, %p149
    %p152 = scmp.ne.s32.totalorder %s135, %s151
    %p153 = scmp.eq.s32.totalorder %s17, 0
    %p154 = por %p152, %p153
    %p155 = scmp.le.s32.totalorder 1, %s11
    %p156 = scmp.lt.s32.totalorder %s11, 3
    %p157 = pnand %p155, %p156
    %p158 = pneg %p157
    // Predicated region
    $region9: #{pool_and_conv.1} parent=5 // pred_check
      _
    $region10: #{pool_and_conv.1} parent=5 // pred_check_branch
      %160 = sbr.rel (%p157) target = $region12
    $region11: #{pool_and_conv.1} parent=5 // pred_region
      %s161 = ssub.s32 %s11, 1
      // Predicated region
      $region13: #{pool_and_conv.1} parent=11 // pred_check
        %p162 = pneg %p58
      $region14: #{pool_and_conv.1} parent=11 // pred_check_branch
        %164 = sbr.rel (%p162) target = $region16
      $region15: #{pool_and_conv.1} parent=11 // pred_region
        _
      $region16: #{pool_and_conv.1} parent=11 // pred_fallthru
        _
      // Predicated region
      $region17: #{pool_and_conv.1} parent=11 // pred_check
        %p165 = pneg %p79
      $region18: #{pool_and_conv.1} parent=11 // pred_check_branch
        %167 = sbr.rel (%p165) target = $region20
      $region19: #{pool_and_conv.1} parent=11 // pred_region
        _
      $region20: #{pool_and_conv.1} parent=11 // pred_fallthru
        _
      // Predicated region
      $region21: #{pool_and_conv.1} parent=11 // pred_check
        %p168 = pneg %p100
      $region22: #{pool_and_conv.1} parent=11 // pred_check_branch
        %170 = sbr.rel (%p168) target = $region24
      $region23: #{pool_and_conv.1} parent=11 // pred_region
        _
      $region24: #{pool_and_conv.1} parent=11 // pred_fallthru
        _
      // Predicated region
      $region25: #{pool_and_conv.1} parent=11 // pred_check
        %p171 = pneg %p121
      $region26: #{pool_and_conv.1} parent=11 // pred_check_branch
        %173 = sbr.rel (%p171) target = $region28
      $region27: #{pool_and_conv.1} parent=11 // pred_region
        _
      $region28: #{pool_and_conv.1} parent=11 // pred_fallthru
        _
    $region12: #{pool_and_conv.1} parent=5 // pred_fallthru
      _
    %p174 = scmp.lt.s32.totalorder %s11, 2
    // Predicated region
    $region29: #{pool_and_conv.1} parent=5 // pred_check
      %p175 = pneg %p174
    $region30: #{pool_and_conv.1} parent=5 // pred_check_branch
      %177 = sbr.rel (%p175) target = $region32
    $region31: #{pool_and_conv.1} parent=5 // pred_region
      // Predicated region
      $region33: #{pool_and_conv.1} parent=31 // pred_check
        %p178 = pneg %p31
      $region34: #{pool_and_conv.1} parent=31 // pred_check_branch
        %180 = sbr.rel (%p178) target = $region36
      $region35: #{pool_and_conv.1} parent=31 // pred_region
        %p181 = scmp.lt.s32.totalorder %s11, 1
        %s182 = scalar_select %p181, %s11, 1
        %s183 = smul.addr %s182, 32
        %s184 = smul.addr %s183, 8
        %s185 = scalar_lea.vmem %s0, %s184
      $region36: #{pool_and_conv.1} parent=31 // pred_fallthru
        _
    $region32: #{pool_and_conv.1} parent=5 // pred_fallthru
      _
    %p186 = scmp.le.s32.totalorder 1, %s11
    %p187 = scmp.lt.s32.totalorder %s11, 3
    %p188 = pnand %p186, %p187
    %p189 = pneg %p188
    // Predicated region
    $region37: #{pool_and_conv.1} parent=5 // pred_check
      _
    $region38: #{pool_and_conv.1} parent=5 // pred_check_branch
      %191 = sbr.rel (%p188) target = $region40
    $region39: #{pool_and_conv.1} parent=5 // pred_region
      %s192 = ssub.s32 %s11, 1
      %p193 = scmp.lt.s32.totalorder %s16, 1
      %s194 = scalar_select %p193, %s16, 1
      %s195 = smul.addr %s194, 32
      %s196 = smul.addr %s195, 8
      %s197 = scalar_lea.vmem %s0, %s196
      %p198 = pneg %p37
      %p199 = pneg %p34
      %p200 = pneg %p58
      %p201 = pneg %p55
      %p202 = pneg %p79
      %p203 = pneg %p76
      %p204 = pneg %p100
      %p205 = pneg %p97
      %p206 = pneg %p121
      %p207 = pneg %p118
      %p208 = pneg %p147
      %p209 = pneg %p144
      %p210 = scmp.lt.s32.totalorder %s16, 1
      %s211 = scalar_select %p210, %s16, 1
      %s212 = smul.addr %s211, 8
      %s213 = smul.addr %s212, 8
      %s214 = scalar_lea.vmem %s5, %s213
      %p215 = scmp.lt.s32.totalorder %s16, 1
      %s216 = scalar_select %p215, %s16, 1
      %s217 = smul.addr %s216, 32
      %s218 = smul.addr %s217, 8
      %s219 = scalar_lea.vmem %s0, %s218
      %p220 = scmp.lt.s32.totalorder %s16, 1
      %s221 = scalar_select %p220, %s16, 1
      %s222 = smul.addr %s221, 8
      %s223 = smul.addr %s222, 8
      %s224 = scalar_lea.vmem %s5, %s223
      %v226 = vld [vmem:[%s219] sm:$0xff]
      %v227 = vld [vmem:[%s219 + $0x8] sm:$0xff]
      %v228 = vld [vmem:[%s219 + $0x10] sm:$0xff]
      %v229 = vld [vmem:[%s219 + $0x18] sm:$0xff]
      %v230 = vld [vmem:[%s219 + $0x20] sm:$0xff]
      %v231 = vld [vmem:[%s219 + $0x28] sm:$0xff]
      %v232 = vld [vmem:[%s219 + $0x30] sm:$0xff]
      %v233 = vld [vmem:[%s219 + $0x38] sm:$0xff]
      %s234 = scalar_lea.vmem %s219, 64
      %v235 = vld [vmem:[%s234] sm:$0xff]
      %v236 = vld [vmem:[%s234 + $0x8] sm:$0xff]
      %v237 = vld [vmem:[%s234 + $0x10] sm:$0xff]
      %v238 = vld [vmem:[%s234 + $0x18] sm:$0xff]
      %v239 = vld [vmem:[%s234 + $0x20] sm:$0xff]
      %v240 = vld [vmem:[%s234 + $0x28] sm:$0xff]
      %v241 = vld [vmem:[%s234 + $0x30] sm:$0xff]
      %v242 = vld [vmem:[%s234 + $0x38] sm:$0xff]
      %v243 = vmax.f32 %v226, %v235
      %v244 = vmax.f32 %v227, %v236
      %v245 = vmax.f32 %v228, %v237
      %v246 = vmax.f32 %v229, %v238
      %v247 = vmax.f32 %v230, %v239
      %v248 = vmax.f32 %v231, %v240
      %v249 = vmax.f32 %v232, %v241
      %v250 = vmax.f32 %v233, %v242
      %s251 = scalar_lea.vmem %s219, 128
      %v252 = vld [vmem:[%s251] sm:$0xff]
      %v253 = vld [vmem:[%s251 + $0x8] sm:$0xff]
      %v254 = vld [vmem:[%s251 + $0x10] sm:$0xff]
      %v255 = vld [vmem:[%s251 + $0x18] sm:$0xff]
      %v256 = vld [vmem:[%s251 + $0x20] sm:$0xff]
      %v257 = vld [vmem:[%s251 + $0x28] sm:$0xff]
      %v258 = vld [vmem:[%s251 + $0x30] sm:$0xff]
      %v259 = vld [vmem:[%s251 + $0x38] sm:$0xff]
      %s260 = scalar_lea.vmem %s219, 192
      %v261 = vld [vmem:[%s260] sm:$0xff]
      %v262 = vld [vmem:[%s260 + $0x8] sm:$0xff]
      %v263 = vld [vmem:[%s260 + $0x10] sm:$0xff]
      %v264 = vld [vmem:[%s260 + $0x18] sm:$0xff]
      %v265 = vld [vmem:[%s260 + $0x20] sm:$0xff]
      %v266 = vld [vmem:[%s260 + $0x28] sm:$0xff]
      %v267 = vld [vmem:[%s260 + $0x30] sm:$0xff]
      %v268 = vld [vmem:[%s260 + $0x38] sm:$0xff]
      %v269 = vmax.f32 %v252, %v261
      %v270 = vmax.f32 %v253, %v262
      %v271 = vmax.f32 %v254, %v263
      %v272 = vmax.f32 %v255, %v264
      %v273 = vmax.f32 %v256, %v265
      %v274 = vmax.f32 %v257, %v266
      %v275 = vmax.f32 %v258, %v267
      %v276 = vmax.f32 %v259, %v268
      %v277 = vmax.f32 %v243, %v269
      %v278 = vmax.f32 %v244, %v270
      %v279 = vmax.f32 %v245, %v271
      %v280 = vmax.f32 %v246, %v272
      %v281 = vmax.f32 %v247, %v273
      %v282 = vmax.f32 %v248, %v274
      %v283 = vmax.f32 %v249, %v275
      %v284 = vmax.f32 %v250, %v276
      %v293 = vrot.slane %v277, 7
      %v294 = vrot.slane %v278, 7
      %v295 = vrot.slane %v279, 7
      %v296 = vrot.slane %v280, 7
      %v297 = vrot.slane %v281, 7
      %v298 = vrot.slane %v282, 7
      %v299 = vrot.slane %v283, 7
      %v300 = vrot.slane %v284, 7
      %vm309 = vcmask 1040384
      %v310 = vsel %vm309, 0.0, %v293
      %v311 = vsel %vm309, 0.0, %v294
      %v312 = vsel %vm309, 0.0, %v295
      %v313 = vsel %vm309, 0.0, %v296
      %v314 = vsel %vm309, 0.0, %v297
      %v315 = vsel %vm309, 0.0, %v298
      %v316 = vsel %vm309, 0.0, %v299
      %v317 = vsel %vm309, 0.0, %v300
      %v318 = vsel %vm309, %v293, 0.0
      %v319 = vsel %vm309, %v294, 0.0
      %v320 = vsel %vm309, %v295, 0.0
      %v321 = vsel %vm309, %v296, 0.0
      %v322 = vsel %vm309, %v297, 0.0
      %v323 = vsel %vm309, %v298, 0.0
      %v324 = vsel %vm309, %v299, 0.0
      %v325 = vsel %vm309, %v300, 0.0
      %vm341 = vcmask 1046528
      %v342 = vrot.slane 0.0, 1
      %v343 = vsel %vm341, %v342, %v342
      %v344 = vrot.slane %v310, 1
      %v345 = vrot.slane %v318, 1
      %v346 = vsel %vm341, %v344, %v345
      %v347 = vrot.slane %v311, 1
      %v348 = vrot.slane %v319, 1
      %v349 = vsel %vm341, %v347, %v348
      %v350 = vrot.slane %v312, 1
      %v351 = vrot.slane %v320, 1
      %v352 = vsel %vm341, %v350, %v351
      %v353 = vrot.slane %v313, 1
      %v354 = vrot.slane %v321, 1
      %v355 = vsel %vm341, %v353, %v354
      %v356 = vrot.slane %v314, 1
      %v357 = vrot.slane %v322, 1
      %v358 = vsel %vm341, %v356, %v357
      %v359 = vrot.slane %v315, 1
      %v360 = vrot.slane %v323, 1
      %v361 = vsel %vm341, %v359, %v360
      %v362 = vrot.slane %v316, 1
      %v363 = vrot.slane %v324, 1
      %v364 = vsel %vm341, %v362, %v363
      %vm365 = vcmask 1045504
      %v366 = vrot.slane 0.0, 2
      %v367 = vsel %vm365, %v366, %v366
      %v368 = vrot.slane %v310, 2
      %v369 = vrot.slane %v318, 2
      %v370 = vsel %vm365, %v368, %v369
      %v371 = vrot.slane %v311, 2
      %v372 = vrot.slane %v319, 2
      %v373 = vsel %vm365, %v371, %v372
      %v374 = vrot.slane %v312, 2
      %v375 = vrot.slane %v320, 2
      %v376 = vsel %vm365, %v374, %v375
      %v377 = vrot.slane %v313, 2
      %v378 = vrot.slane %v321, 2
      %v379 = vsel %vm365, %v377, %v378
      %v380 = vrot.slane %v314, 2
      %v381 = vrot.slane %v322, 2
      %v382 = vsel %vm365, %v380, %v381
      %v383 = vrot.slane %v315, 2
      %v384 = vrot.slane %v323, 2
      %v385 = vsel %vm365, %v383, %v384
      %v386 = vrot.slane %v316, 2
      %v387 = vrot.slane %v324, 2
      %v388 = vsel %vm365, %v386, %v387
      %v391 = vrot.slane %v317, 1
      %v392 = vrot.slane %v325, 1
      %v393 = vsel %vm341, %v391, %v392
      %v394 = vrot.slane %v317, 2
      %v395 = vrot.slane %v325, 2
      %v396 = vsel %vm365, %v394, %v395
      %397 = vrot.lane.b32.xlu0 %v343, 4
      %v398 = vpop.permute.xlu0 %397
      %399 = vrot.lane.b32.xlu0 %v346, 4
      %v400 = vpop.permute.xlu0 %399
      %401 = vrot.lane.b32.xlu0 %v349, 4
      %v402 = vpop.permute.xlu0 %401
      %403 = vrot.lane.b32.xlu0 %v352, 4
      %v404 = vpop.permute.xlu0 %403
      %405 = vrot.lane.b32.xlu0 %v355, 4
      %v406 = vpop.permute.xlu0 %405
      %407 = vrot.lane.b32.xlu0 %v358, 4
      %v408 = vpop.permute.xlu0 %407
      %409 = vrot.lane.b32.xlu0 %v361, 4
      %v410 = vpop.permute.xlu0 %409
      %411 = vrot.lane.b32.xlu0 %v364, 4
      %v412 = vpop.permute.xlu0 %411
      %421 = vrot.lane.b32.xlu0 %v367, 8
      %v422 = vpop.permute.xlu0 %421
      %423 = vrot.lane.b32.xlu0 %v370, 8
      %v424 = vpop.permute.xlu0 %423
      %425 = vrot.lane.b32.xlu0 %v373, 8
      %v426 = vpop.permute.xlu0 %425
      %427 = vrot.lane.b32.xlu0 %v376, 8
      %v428 = vpop.permute.xlu0 %427
      %429 = vrot.lane.b32.xlu0 %v379, 8
      %v430 = vpop.permute.xlu0 %429
      %431 = vrot.lane.b32.xlu0 %v382, 8
      %v432 = vpop.permute.xlu0 %431
      %433 = vrot.lane.b32.xlu0 %v385, 8
      %v434 = vpop.permute.xlu0 %433
      %435 = vrot.lane.b32.xlu0 %v388, 8
      %v436 = vpop.permute.xlu0 %435
      %445 = vrot.lane.b32.xlu0 %v310, 12
      %v446 = vpop.permute.xlu0 %445
      %447 = vrot.lane.b32.xlu0 %v311, 12
      %v448 = vpop.permute.xlu0 %447
      %449 = vrot.lane.b32.xlu0 %v312, 12
      %v450 = vpop.permute.xlu0 %449
      %451 = vrot.lane.b32.xlu0 %v313, 12
      %v452 = vpop.permute.xlu0 %451
      %453 = vrot.lane.b32.xlu0 %v314, 12
      %v454 = vpop.permute.xlu0 %453
      %455 = vrot.lane.b32.xlu0 %v315, 12
      %v456 = vpop.permute.xlu0 %455
      %457 = vrot.lane.b32.xlu0 %v316, 12
      %v458 = vpop.permute.xlu0 %457
      %459 = vrot.lane.b32.xlu0 %v317, 12
      %v460 = vpop.permute.xlu0 %459
      %469 = vrot.lane.b32.xlu0 %v346, 16
      %v470 = vpop.permute.xlu0 %469
      %471 = vrot.lane.b32.xlu0 %v349, 16
      %v472 = vpop.permute.xlu0 %471
      %473 = vrot.lane.b32.xlu0 %v352, 16
      %v474 = vpop.permute.xlu0 %473
      %475 = vrot.lane.b32.xlu0 %v355, 16
      %v476 = vpop.permute.xlu0 %475
      %477 = vrot.lane.b32.xlu0 %v358, 16
      %v478 = vpop.permute.xlu0 %477
      %479 = vrot.lane.b32.xlu0 %v361, 16
      %v480 = vpop.permute.xlu0 %479
      %481 = vrot.lane.b32.xlu0 %v364, 16
      %v482 = vpop.permute.xlu0 %481
      %483 = vrot.lane.b32.xlu0 %v393, 16
      %v484 = vpop.permute.xlu0 %483
      %493 = vrot.lane.b32.xlu0 %v370, 20
      %v494 = vpop.permute.xlu0 %493
      %495 = vrot.lane.b32.xlu0 %v373, 20
      %v496 = vpop.permute.xlu0 %495
      %497 = vrot.lane.b32.xlu0 %v376, 20
      %v498 = vpop.permute.xlu0 %497
      %499 = vrot.lane.b32.xlu0 %v379, 20
      %v500 = vpop.permute.xlu0 %499
      %501 = vrot.lane.b32.xlu0 %v382, 20
      %v502 = vpop.permute.xlu0 %501
      %503 = vrot.lane.b32.xlu0 %v385, 20
      %v504 = vpop.permute.xlu0 %503
      %505 = vrot.lane.b32.xlu0 %v388, 20
      %v506 = vpop.permute.xlu0 %505
      %507 = vrot.lane.b32.xlu0 %v396, 20
      %v508 = vpop.permute.xlu0 %507
      %517 = vrot.lane.b32.xlu0 %v311, 24
      %v518 = vpop.permute.xlu0 %517
      %519 = vrot.lane.b32.xlu0 %v312, 24
      %v520 = vpop.permute.xlu0 %519
      %521 = vrot.lane.b32.xlu0 %v313, 24
      %v522 = vpop.permute.xlu0 %521
      %523 = vrot.lane.b32.xlu0 %v314, 24
      %v524 = vpop.permute.xlu0 %523
      %525 = vrot.lane.b32.xlu0 %v315, 24
      %v526 = vpop.permute.xlu0 %525
      %527 = vrot.lane.b32.xlu0 %v316, 24
      %v528 = vpop.permute.xlu0 %527
      %529 = vrot.lane.b32.xlu0 %v317, 24
      %v530 = vpop.permute.xlu0 %529
      %531 = vrot.lane.b32.xlu0 0.0, 24
      %v532 = vpop.permute.xlu0 %531
      %541 = vrot.lane.b32.xlu0 %v349, 28
      %v542 = vpop.permute.xlu0 %541
      %543 = vrot.lane.b32.xlu0 %v352, 28
      %v544 = vpop.permute.xlu0 %543
      %545 = vrot.lane.b32.xlu0 %v355, 28
      %v546 = vpop.permute.xlu0 %545
      %547 = vrot.lane.b32.xlu0 %v358, 28
      %v548 = vpop.permute.xlu0 %547
      %549 = vrot.lane.b32.xlu0 %v361, 28
      %v550 = vpop.permute.xlu0 %549
      %551 = vrot.lane.b32.xlu0 %v364, 28
      %v552 = vpop.permute.xlu0 %551
      %553 = vrot.lane.b32.xlu0 %v393, 28
      %v554 = vpop.permute.xlu0 %553
      %555 = vrot.lane.b32.xlu0 %v343, 28
      %v556 = vpop.permute.xlu0 %555
      %565 = vrot.lane.b32.xlu0 %v373, 32
      %v566 = vpop.permute.xlu0 %565
      %567 = vrot.lane.b32.xlu0 %v376, 32
      %v568 = vpop.permute.xlu0 %567
      %569 = vrot.lane.b32.xlu0 %v379, 32
      %v570 = vpop.permute.xlu0 %569
      %571 = vrot.lane.b32.xlu0 %v382, 32
      %v572 = vpop.permute.xlu0 %571
      %573 = vrot.lane.b32.xlu0 %v385, 32
      %v574 = vpop.permute.xlu0 %573
      %575 = vrot.lane.b32.xlu0 %v388, 32
      %v576 = vpop.permute.xlu0 %575
      %577 = vrot.lane.b32.xlu0 %v396, 32
      %v578 = vpop.permute.xlu0 %577
      %579 = vrot.lane.b32.xlu0 %v367, 32
      %v580 = vpop.permute.xlu0 %579
      %vm589 = vcmask 31744
      %v590 = vsel %vm589, 0.0, %v398
      %v591 = vsel %vm589, %v310, %v400
      %v592 = vsel %vm589, %v311, %v402
      %v593 = vsel %vm589, %v312, %v404
      %v594 = vsel %vm589, %v313, %v406
      %v595 = vsel %vm589, %v314, %v408
      %v596 = vsel %vm589, %v315, %v410
      %v597 = vsel %vm589, %v316, %v412
      %vm598 = vcmask 64512
      %v599 = vsel %vm598, %v590, %v422
      %v600 = vsel %vm598, %v591, %v424
      %v601 = vsel %vm598, %v592, %v426
      %v602 = vsel %vm598, %v593, %v428
      %v603 = vsel %vm598, %v594, %v430
      %v604 = vsel %vm598, %v595, %v432
      %v605 = vsel %vm598, %v596, %v434
      %v606 = vsel %vm598, %v597, %v436
      %vm607 = vcmask 97280
      %v608 = vsel %vm607, %v599, %v446
      %v609 = vsel %vm607, %v600, %v448
      %v610 = vsel %vm607, %v601, %v450
      %v611 = vsel %vm607, %v602, %v452
      %v612 = vsel %vm607, %v603, %v454
      %v613 = vsel %vm607, %v604, %v456
      %v614 = vsel %vm607, %v605, %v458
      %v615 = vsel %vm607, %v606, %v460
      %vm616 = vcmask 130048
      %v617 = vsel %vm616, %v608, %v470
      %v618 = vsel %vm616, %v609, %v472
      %v619 = vsel %vm616, %v610, %v474
      %v620 = vsel %vm616, %v611, %v476
      %v621 = vsel %vm616, %v612, %v478
      %v622 = vsel %vm616, %v613, %v480
      %v623 = vsel %vm616, %v614, %v482
      %v624 = vsel %vm616, %v615, %v484
      %vm625 = vcmask 162816
      %v626 = vsel %vm625, %v617, %v494
      %v627 = vsel %vm625, %v618, %v496
      %v628 = vsel %vm625, %v619, %v498
      %v629 = vsel %vm625, %v620, %v500
      %v630 = vsel %vm625, %v621, %v502
      %v631 = vsel %vm625, %v622, %v504
      %v632 = vsel %vm625, %v623, %v506
      %v633 = vsel %vm625, %v624, %v508
      %vm634 = vcmask 195584
      %v635 = vsel %vm634, %v626, %v518
      %v636 = vsel %vm634, %v627, %v520
      %v637 = vsel %vm634, %v628, %v522
      %v638 = vsel %vm634, %v629, %v524
      %v639 = vsel %vm634, %v630, %v526
      %v640 = vsel %vm634, %v631, %v528
      %v641 = vsel %vm634, %v632, %v530
      %v642 = vsel %vm634, %v633, %v532
      %vm643 = vcmask 228352
      %v644 = vsel %vm643, %v635, %v542
      %v645 = vsel %vm643, %v636, %v544
      %v646 = vsel %vm643, %v637, %v546
      %v647 = vsel %vm643, %v638, %v548
      %v648 = vsel %vm643, %v639, %v550
      %v649 = vsel %vm643, %v640, %v552
      %v650 = vsel %vm643, %v641, %v554
      %v651 = vsel %vm643, %v642, %v556
      %vm652 = vcmask 261120
      %v653 = vsel %vm652, %v644, %v566
      %v654 = vsel %vm652, %v645, %v568
      %v655 = vsel %vm652, %v646, %v570
      %v656 = vsel %vm652, %v647, %v572
      %v657 = vsel %vm652, %v648, %v574
      %v658 = vsel %vm652, %v649, %v576
      %v659 = vsel %vm652, %v650, %v578
      %v660 = vsel %vm652, %v651, %v580
      %v661 = vpack.c.bf16 %v654, %v653
      %v662 = vpack.c.bf16 %v656, %v655
      %v663 = vpack.c.bf16 %v658, %v657
      %v664 = vpack.c.bf16 %v660, %v659
      %v665 = vld [vmem:[%s1] sm:$0xf]
      %v666 = vld [vmem:[%s1 + $0x4] sm:$0xf]
      %v667 = vld [vmem:[%s1 + $0x8] sm:$0xf]
      %v668 = vld [vmem:[%s1 + $0xc] sm:$0xf]
      %v669 = vld [vmem:[%s1 + $0x10] sm:$0x3]
      %v670 = vld [vmem:[%s3] sm:$0x1]
      %v672 = vperm.slane %v670, 0
      %v679 = vunpack.c.l.b16 %v665
      %v680 = vunpack.c.l.b16 %v666
      %v681 = vunpack.c.l.b16 %v667
      %v682 = vunpack.c.l.b16 %v668
      %v683 = vunpack.c.l.b16 %v669
      %v684 = vpack.c.b16 %v680, %v679
      %v685 = vpack.c.b16 %v682, %v681
      %v686 = vpack.c.b16 %v683, %v683
      %vm689 = vcmask 293888
      %v691 = vsel %vm689, %v661, 0
      %v694 = vsel %vm689, %v662, 0
      %v697 = vsel %vm689, %v663, 0
      %v700 = vsel %vm689, %v664, 0
      %vm702 = vcmask 1041408
      %v704 = vsel %vm702, %v686, 0
      %706 = vmatpush.bf16.msra.mxu0 0
      %707 = vmatpush.bf16.msra.mxu0 0
      %708 = vmatpush.bf16.msra.mxu0 0
      %709 = vmatpush.bf16.msra.mxu0 0
      %710 = vmatpush.bf16.msra.mxu0 0
      %711 = vmatpush.bf16.msra.mxu0 %v704
      %712 = vmatpush.bf16.msra.mxu0 %v685
      %713 = vmatpush.bf16.msra.mxu0 %v684
      %714 = vmatmul.bf16.gmra.mxu0 %v691
      %v715 = vpop.f32.mrf.mxu0
      %v716 = vadd.f32 %v672, %v715
      %v717 = vpop.f32.mrf.mxu0
      %v718 = vadd.f32 %v672, %v717
      %719 = vmatmul.bf16.gmra.mxu0 %v694
      %v720 = vpop.f32.mrf.mxu0
      %v721 = vadd.f32 %v672, %v720
      %v722 = vpop.f32.mrf.mxu0
      %v723 = vadd.f32 %v672, %v722
      %724 = vmatmul.bf16.gmra.mxu0 %v697
      %v725 = vpop.f32.mrf.mxu0
      %v726 = vadd.f32 %v672, %v725
      %v727 = vpop.f32.mrf.mxu0
      %v728 = vadd.f32 %v672, %v727
      %729 = vmatmul.bf16.gmra.mxu0 %v700
      %v730 = vpop.f32.mrf.mxu0
      %v731 = vadd.f32 %v672, %v730
      %v732 = vpop.f32.mrf.mxu0
      %v733 = vadd.f32 %v672, %v732
      %734 = vdwg.mxu0
      %v735 = vmax.f32 %v716, 0.0
      %v736 = vmax.f32 %v718, 0.0
      %v737 = vmax.f32 %v721, 0.0
      %v738 = vmax.f32 %v723, 0.0
      %v739 = vmax.f32 %v726, 0.0
      %v740 = vmax.f32 %v728, 0.0
      %v741 = vmax.f32 %v731, 0.0
      %v742 = vmax.f32 %v733, 0.0
      %v751 = vrot.slane %v735, 7
      %v752 = vrot.slane %v736, 7
      %v753 = vrot.slane %v737, 7
      %v754 = vrot.slane %v738, 7
      %v755 = vrot.slane %v739, 7
      %v756 = vrot.slane %v740, 7
      %v757 = vrot.slane %v741, 7
      %v758 = vrot.slane %v742, 7
      %v767 = vsel %vm309, 0.0, %v751
      %v768 = vsel %vm309, 0.0, %v752
      %v769 = vsel %vm309, 0.0, %v753
      %v770 = vsel %vm309, 0.0, %v754
      %v771 = vsel %vm309, 0.0, %v755
      %v772 = vsel %vm309, 0.0, %v756
      %v773 = vsel %vm309, 0.0, %v757
      %v774 = vsel %vm309, 0.0, %v758
      %v775 = vsel %vm309, %v751, 0.0
      %v776 = vsel %vm309, %v752, 0.0
      %v777 = vsel %vm309, %v753, 0.0
      %v778 = vsel %vm309, %v754, 0.0
      %v779 = vsel %vm309, %v755, 0.0
      %v780 = vsel %vm309, %v756, 0.0
      %v781 = vsel %vm309, %v757, 0.0
      %v782 = vsel %vm309, %v758, 0.0
      %v783 = vpack.c.bf16 0.0, 0.0
      %v784 = vpack.c.bf16 %v767, %v767
      %v785 = vpack.c.bf16 %v775, %v775
      %v786 = vpack.c.bf16 %v768, %v768
      %v787 = vpack.c.bf16 %v776, %v776
      %v788 = vpack.c.bf16 %v769, %v769
      %v789 = vpack.c.bf16 %v777, %v777
      %v790 = vpack.c.bf16 %v770, %v770
      %v791 = vpack.c.bf16 %v778, %v778
      %v792 = vpack.c.bf16 %v771, %v771
      %v793 = vpack.c.bf16 %v779, %v779
      %v794 = vpack.c.bf16 %v772, %v772
      %v795 = vpack.c.bf16 %v780, %v780
      %v796 = vpack.c.bf16 %v773, %v773
      %v797 = vpack.c.bf16 %v781, %v781
      %v798 = vpack.c.bf16 %v774, %v774
      %v799 = vpack.c.bf16 %v782, %v782
      %800 = vst [vmem:[#allocation2] sm:$0xf] %v783
      %801 = vst [vmem:[#allocation2 + $0x4] sm:$0x1] %v783
      %802 = vst [vmem:[#allocation2 + $0x8] sm:$0xf] %v784
      %803 = vst [vmem:[#allocation2 + $0xc] sm:$0x1] %v785
      %804 = vst [vmem:[#allocation2 + $0x10] sm:$0xf] %v786
      %805 = vst [vmem:[#allocation2 + $0x14] sm:$0x1] %v787
      %806 = vst [vmem:[#allocation2 + $0x18] sm:$0xf] %v788
      %807 = vst [vmem:[#allocation2 + $0x1c] sm:$0x1] %v789
      %808 = vst [vmem:[#allocation2 + $0x20] sm:$0xf] %v790
      %809 = vst [vmem:[#allocation2 + $0x24] sm:$0x1] %v791
      %810 = vst [vmem:[#allocation2 + $0x28] sm:$0xf] %v792
      %811 = vst [vmem:[#allocation2 + $0x2c] sm:$0x1] %v793
      %812 = vst [vmem:[#allocation2 + $0x30] sm:$0xf] %v794
      %813 = vst [vmem:[#allocation2 + $0x34] sm:$0x1] %v795
      %814 = vst [vmem:[#allocation2 + $0x38] sm:$0xf] %v796
      %815 = vst [vmem:[#allocation2 + $0x3c] sm:$0x1] %v797
      %816 = vst [vmem:[#allocation2 + $0x40] sm:$0xf] %v798
      %817 = vst [vmem:[#allocation2 + $0x44] sm:$0x1] %v799
      %818 = vst [vmem:[#allocation2 + $0x48] sm:$0xf] %v783
      %819 = vst [vmem:[#allocation2 + $0x4c] sm:$0x1] %v783
      %v820 = vld [vmem:[#allocation2] sm:$0xf]
      %v821 = vld [vmem:[#allocation2 + $0x8] sm:$0xf]
      %v822 = vld [vmem:[#allocation2 + $0x10] sm:$0xf]
      %v823 = vld [vmem:[#allocation2 + $0x18] sm:$0xf]
      %v824 = vld [vmem:[#allocation2 + $0x20] sm:$0xf]
      %v825 = vld [vmem:[#allocation2 + $0x28] sm:$0xf]
      %v826 = vld [vmem:[#allocation2 + $0x30] sm:$0xf]
      %v827 = vld [vmem:[#allocation2 + $0x38] sm:$0xf]
      %v828 = vld [vmem:[%s2] sm:$0xf]
      %v829 = vld [vmem:[%s2 + $0x4] sm:$0xf]
      %v830 = vld [vmem:[%s2 + $0x8] sm:$0xf]
      %v831 = vld [vmem:[%s2 + $0xc] sm:$0xf]
      %v832 = vld [vmem:[%s2 + $0x10] sm:$0xf]
      %v833 = vld [vmem:[%s2 + $0x14] sm:$0xf]
      %v834 = vld [vmem:[%s2 + $0x18] sm:$0xf]
      %v835 = vld [vmem:[%s2 + $0x1c] sm:$0xf]
      %v836 = vld [vmem:[%s2 + $0x20] sm:$0xf]
      %v837 = vld [vmem:[%s2 + $0x24] sm:$0xf]
      %v838 = vld [vmem:[%s2 + $0x28] sm:$0xf]
      %v839 = vld [vmem:[%s2 + $0x2c] sm:$0xf]
      %v840 = vld [vmem:[%s2 + $0x30] sm:$0xf]
      %v841 = vld [vmem:[%s2 + $0x34] sm:$0xf]
      %v842 = vld [vmem:[%s2 + $0x38] sm:$0xf]
      %v843 = vld [vmem:[%s2 + $0x3c] sm:$0xf]
      %v844 = vld [vmem:[#allocation2 + $0x4] sm:$0x1]
      %v845 = vld [vmem:[#allocation2 + $0xc] sm:$0x1]
      %v846 = vld [vmem:[#allocation2 + $0x14] sm:$0x1]
      %v847 = vld [vmem:[#allocation2 + $0x1c] sm:$0x1]
      %v848 = vld [vmem:[#allocation2 + $0x24] sm:$0x1]
      %v849 = vld [vmem:[#allocation2 + $0x2c] sm:$0x1]
      %v850 = vld [vmem:[#allocation2 + $0x34] sm:$0x1]
      %v851 = vld [vmem:[#allocation2 + $0x3c] sm:$0x1]
      %vm852 = vsmask.f32 3328
      %vm853 = vsmask.f32 7440
      %vm854 = vmor %vm852, %vm853
      %v856 = vshrl.u32 %v820, 16
      %v858 = vrot.slane %v856, 4
      %v859 = vshll.u32 %v820, 16
      %v861 = vrot.slane %v859, 5
      %v862 = vor.u32 %v858, %v861
      %v863 = vrot.slane %v862, 4
      %v865 = vshll.u32 %v844, 16
      %v867 = vrot.slane %v865, 5
      %v868 = vsel %vm854, %v863, %v867
      %v870 = vshrl.u32 %v821, 16
      %v872 = vrot.slane %v870, 4
      %v873 = vshll.u32 %v821, 16
      %v875 = vrot.slane %v873, 5
      %v876 = vor.u32 %v872, %v875
      %v877 = vrot.slane %v876, 4
      %v879 = vshll.u32 %v845, 16
      %v881 = vrot.slane %v879, 5
      %v882 = vsel %vm854, %v877, %v881
      %v884 = vshrl.u32 %v822, 16
      %v886 = vrot.slane %v884, 4
      %v887 = vshll.u32 %v822, 16
      %v889 = vrot.slane %v887, 5
      %v890 = vor.u32 %v886, %v889
      %v891 = vrot.slane %v890, 4
      %v893 = vshll.u32 %v846, 16
      %v895 = vrot.slane %v893, 5
      %v896 = vsel %vm854, %v891, %v895
      %v898 = vshrl.u32 %v823, 16
      %v900 = vrot.slane %v898, 4
      %v901 = vshll.u32 %v823, 16
      %v903 = vrot.slane %v901, 5
      %v904 = vor.u32 %v900, %v903
      %v905 = vrot.slane %v904, 4
      %v907 = vshll.u32 %v847, 16
      %v909 = vrot.slane %v907, 5
      %v910 = vsel %vm854, %v905, %v909
      %v912 = vshrl.u32 %v824, 16
      %v914 = vrot.slane %v912, 4
      %v915 = vshll.u32 %v824, 16
      %v917 = vrot.slane %v915, 5
      %v918 = vor.u32 %v914, %v917
      %v919 = vrot.slane %v918, 4
      %v921 = vshll.u32 %v848, 16
      %v923 = vrot.slane %v921, 5
      %v924 = vsel %vm854, %v919, %v923
      %v926 = vshrl.u32 %v825, 16
      %v928 = vrot.slane %v926, 4
      %v929 = vshll.u32 %v825, 16
      %v931 = vrot.slane %v929, 5
      %v932 = vor.u32 %v928, %v931
      %v933 = vrot.slane %v932, 4
      %v935 = vshll.u32 %v849, 16
      %v937 = vrot.slane %v935, 5
      %v938 = vsel %vm854, %v933, %v937
      %v940 = vshrl.u32 %v826, 16
      %v942 = vrot.slane %v940, 4
      %v943 = vshll.u32 %v826, 16
      %v945 = vrot.slane %v943, 5
      %v946 = vor.u32 %v942, %v945
      %v947 = vrot.slane %v946, 4
      %v949 = vshll.u32 %v850, 16
      %v951 = vrot.slane %v949, 5
      %v952 = vsel %vm854, %v947, %v951
      %v954 = vshrl.u32 %v827, 16
      %v956 = vrot.slane %v954, 4
      %v957 = vshll.u32 %v827, 16
      %v959 = vrot.slane %v957, 5
      %v960 = vor.u32 %v956, %v959
      %v961 = vrot.slane %v960, 4
      %v963 = vshll.u32 %v851, 16
      %v965 = vrot.slane %v963, 5
      %v966 = vsel %vm854, %v961, %v965
      %v967 = vld [vmem:[%s2 + $0x40] sm:$0xf]
      %v968 = vld [vmem:[%s2 + $0x44] sm:$0xf]
      %v969 = vld [vmem:[%s2 + $0x48] sm:$0xf]
      %v970 = vld [vmem:[%s2 + $0x4c] sm:$0xf]
      %v971 = vld [vmem:[%s2 + $0x50] sm:$0xf]
      %v972 = vld [vmem:[%s2 + $0x54] sm:$0xf]
      %v973 = vld [vmem:[%s2 + $0x58] sm:$0xf]
      %v974 = vld [vmem:[%s2 + $0x5c] sm:$0xf]
      %v975 = vld [vmem:[%s2 + $0x60] sm:$0xf]
      %v976 = vld [vmem:[%s2 + $0x64] sm:$0xf]
      %v977 = vld [vmem:[%s2 + $0x68] sm:$0xf]
      %v978 = vld [vmem:[%s2 + $0x6c] sm:$0xf]
      %v979 = vld [vmem:[%s2 + $0x70] sm:$0xf]
      %v980 = vld [vmem:[%s2 + $0x74] sm:$0xf]
      %v981 = vld [vmem:[%s2 + $0x78] sm:$0xf]
      %v982 = vld [vmem:[%s2 + $0x7c] sm:$0xf]
      %v983 = vunpack.c.l.b16 %v868
      %v984 = vunpack.c.l.b16 %v882
      %v985 = vunpack.c.l.b16 %v896
      %v986 = vunpack.c.l.b16 %v910
      %v987 = vunpack.c.l.b16 %v924
      %v988 = vunpack.c.l.b16 %v938
      %v989 = vunpack.c.l.b16 %v952
      %v990 = vunpack.c.l.b16 %v966
      %v991 = vpack.c.b16 %v984, %v983
      %v992 = vpack.c.b16 %v986, %v985
      %v993 = vpack.c.b16 %v988, %v987
      %v994 = vpack.c.b16 %v990, %v989
      %v1015 = vunpack.c.l.b16 %v967
      %v1016 = vunpack.c.l.b16 %v968
      %v1017 = vunpack.c.l.b16 %v969
      %v1018 = vunpack.c.l.b16 %v970
      %v1019 = vunpack.c.l.b16 %v971
      %v1020 = vunpack.c.l.b16 %v972
      %v1021 = vunpack.c.l.b16 %v973
      %v1022 = vunpack.c.l.b16 %v974
      %v1023 = vunpack.c.l.b16 %v975
      %v1024 = vunpack.c.l.b16 %v976
      %v1025 = vunpack.c.l.b16 %v977
      %v1026 = vunpack.c.l.b16 %v978
      %v1027 = vunpack.c.l.b16 %v979
      %v1028 = vunpack.c.l.b16 %v980
      %v1029 = vunpack.c.l.b16 %v981
      %v1030 = vunpack.c.l.b16 %v982
      %v1031 = vpack.c.b16 %v1016, %v1015
      %v1032 = vpack.c.b16 %v1018, %v1017
      %v1033 = vpack.c.b16 %v1020, %v1019
      %v1034 = vpack.c.b16 %v1022, %v1021
      %v1035 = vpack.c.b16 %v1024, %v1023
      %v1036 = vpack.c.b16 %v1026, %v1025
      %v1037 = vpack.c.b16 %v1028, %v1027
      %v1038 = vpack.c.b16 %v1030, %v1029
      %1047 = vmatpush.bf16.msra.mxu0 %v1038
      %1048 = vmatpush.bf16.msra.mxu0 %v1037
      %1049 = vmatpush.bf16.msra.mxu0 %v1036
      %1050 = vmatpush.bf16.msra.mxu0 %v1035
      %1051 = vmatpush.bf16.msra.mxu0 %v1034
      %1052 = vmatpush.bf16.msra.mxu0 %v1033
      %1053 = vmatpush.bf16.msra.mxu0 %v1032
      %1054 = vmatpush.bf16.msra.mxu0 %v1031
      %1055 = vmatmul.bf16.gmra.mxu0 %v991
      %v1056 = vpop.f32.mrf.mxu0
      %v1057 = vadd.f32 0.0, %v1056
      %v1058 = vpop.f32.mrf.mxu0
      %v1059 = vadd.f32 0.0, %v1058
      %1060 = vmatmul.bf16.gmra.mxu0 %v992
      %v1061 = vpop.f32.mrf.mxu0
      %v1062 = vadd.f32 0.0, %v1061
      %v1063 = vpop.f32.mrf.mxu0
      %v1064 = vadd.f32 0.0, %v1063
      %1065 = vmatmul.bf16.gmra.mxu0 %v993
      %v1066 = vpop.f32.mrf.mxu0
      %v1067 = vadd.f32 0.0, %v1066
      %v1068 = vpop.f32.mrf.mxu0
      %v1069 = vadd.f32 0.0, %v1068
      %1070 = vmatmul.bf16.gmra.mxu0 %v994
      %v1071 = vpop.f32.mrf.mxu0
      %v1072 = vadd.f32 0.0, %v1071
      %v1073 = vpop.f32.mrf.mxu0
      %v1074 = vadd.f32 0.0, %v1073
      %1075 = vdwg.mxu0
      %v1084 = vunpack.c.l.b16 %v820
      %v1085 = vunpack.c.l.b16 %v821
      %v1086 = vunpack.c.l.b16 %v822
      %v1087 = vunpack.c.l.b16 %v823
      %v1088 = vunpack.c.l.b16 %v824
      %v1089 = vunpack.c.l.b16 %v825
      %v1090 = vunpack.c.l.b16 %v826
      %v1091 = vunpack.c.l.b16 %v827
      %v1092 = vpack.c.b16 %v1085, %v1084
      %v1093 = vpack.c.b16 %v1087, %v1086
      %v1094 = vpack.c.b16 %v1089, %v1088
      %v1095 = vpack.c.b16 %v1091, %v1090
      %v1116 = vunpack.c.l.b16 %v828
      %v1117 = vunpack.c.l.b16 %v829
      %v1118 = vunpack.c.l.b16 %v830
      %v1119 = vunpack.c.l.b16 %v831
      %v1120 = vunpack.c.l.b16 %v832
      %v1121 = vunpack.c.l.b16 %v833
      %v1122 = vunpack.c.l.b16 %v834
      %v1123 = vunpack.c.l.b16 %v835
      %v1124 = vunpack.c.l.b16 %v836
      %v1125 = vunpack.c.l.b16 %v837
      %v1126 = vunpack.c.l.b16 %v838
      %v1127 = vunpack.c.l.b16 %v839
      %v1128 = vunpack.c.l.b16 %v840
      %v1129 = vunpack.c.l.b16 %v841
      %v1130 = vunpack.c.l.b16 %v842
      %v1131 = vunpack.c.l.b16 %v843
      %v1132 = vpack.c.b16 %v1117, %v1116
      %v1133 = vpack.c.b16 %v1119, %v1118
      %v1134 = vpack.c.b16 %v1121, %v1120
      %v1135 = vpack.c.b16 %v1123, %v1122
      %v1136 = vpack.c.b16 %v1125, %v1124
      %v1137 = vpack.c.b16 %v1127, %v1126
      %v1138 = vpack.c.b16 %v1129, %v1128
      %v1139 = vpack.c.b16 %v1131, %v1130
      %1148 = vmatpush.bf16.msra.mxu0 %v1139
      %1149 = vmatpush.bf16.msra.mxu0 %v1138
      %1150 = vmatpush.bf16.msra.mxu0 %v1137
      %1151 = vmatpush.bf16.msra.mxu0 %v1136
      %1152 = vmatpush.bf16.msra.mxu0 %v1135
      %1153 = vmatpush.bf16.msra.mxu0 %v1134
      %1154 = vmatpush.bf16.msra.mxu0 %v1133
      %1155 = vmatpush.bf16.msra.mxu0 %v1132
      %1156 = vmatmul.bf16.gmra.mxu0 %v1092
      %v1157 = vpop.f32.mrf.mxu0
      %v1158 = vadd.f32 %v1057, %v1157
      %v1159 = vpop.f32.mrf.mxu0
      %v1160 = vadd.f32 %v1059, %v1159
      %1161 = vmatmul.bf16.gmra.mxu0 %v1093
      %v1162 = vpop.f32.mrf.mxu0
      %v1163 = vadd.f32 %v1062, %v1162
      %v1164 = vpop.f32.mrf.mxu0
      %v1165 = vadd.f32 %v1064, %v1164
      %1166 = vmatmul.bf16.gmra.mxu0 %v1094
      %v1167 = vpop.f32.mrf.mxu0
      %v1168 = vadd.f32 %v1067, %v1167
      %v1169 = vpop.f32.mrf.mxu0
      %v1170 = vadd.f32 %v1069, %v1169
      %1171 = vmatmul.bf16.gmra.mxu0 %v1095
      %v1172 = vpop.f32.mrf.mxu0
      %v1173 = vadd.f32 %v1072, %v1172
      %v1174 = vpop.f32.mrf.mxu0
      %v1175 = vadd.f32 %v1074, %v1174
      %1176 = vdwg.mxu0
      %v1177 = vld [vmem:[#allocation2] sm:$0xe]
      %v1178 = vld [vmem:[#allocation2 + $0x8] sm:$0xe]
      %v1179 = vld [vmem:[#allocation2 + $0x10] sm:$0xe]
      %v1180 = vld [vmem:[#allocation2 + $0x18] sm:$0xe]
      %v1181 = vld [vmem:[#allocation2 + $0x20] sm:$0xe]
      %v1182 = vld [vmem:[#allocation2 + $0x28] sm:$0xe]
      %v1183 = vld [vmem:[#allocation2 + $0x30] sm:$0xe]
      %v1184 = vld [vmem:[#allocation2 + $0x38] sm:$0xe]
      %vm1201 = vcmask 1042432
      %vm1202 = vcmask 1046532
      %vm1203 = vmor %vm1201, %vm1202
      %v1204 = vrot.slane %v1177, 5
      %v1205 = vrot.slane %v1204, 4
      %v1206 = vrot.slane %v844, 5
      %v1207 = vsel %vm1203, %v1205, %v1206
      %v1208 = vrot.slane %v1178, 5
      %v1209 = vrot.slane %v1208, 4
      %v1210 = vrot.slane %v845, 5
      %v1211 = vsel %vm1203, %v1209, %v1210
      %v1212 = vrot.slane %v1179, 5
      %v1213 = vrot.slane %v1212, 4
      %v1214 = vrot.slane %v846, 5
      %v1215 = vsel %vm1203, %v1213, %v1214
      %v1216 = vrot.slane %v1180, 5
      %v1217 = vrot.slane %v1216, 4
      %v1218 = vrot.slane %v847, 5
      %v1219 = vsel %vm1203, %v1217, %v1218
      %v1220 = vrot.slane %v1181, 5
      %v1221 = vrot.slane %v1220, 4
      %v1222 = vrot.slane %v848, 5
      %v1223 = vsel %vm1203, %v1221, %v1222
      %v1224 = vrot.slane %v1182, 5
      %v1225 = vrot.slane %v1224, 4
      %v1226 = vrot.slane %v849, 5
      %v1227 = vsel %vm1203, %v1225, %v1226
      %v1228 = vrot.slane %v1183, 5
      %v1229 = vrot.slane %v1228, 4
      %v1230 = vrot.slane %v850, 5
      %v1231 = vsel %vm1203, %v1229, %v1230
      %v1232 = vrot.slane %v1184, 5
      %v1233 = vrot.slane %v1232, 4
      %v1234 = vrot.slane %v851, 5
      %v1235 = vsel %vm1203, %v1233, %v1234
      %v1236 = vld [vmem:[%s2 + $0x80] sm:$0xf]
      %v1237 = vld [vmem:[%s2 + $0x84] sm:$0xf]
      %v1238 = vld [vmem:[%s2 + $0x88] sm:$0xf]
      %v1239 = vld [vmem:[%s2 + $0x8c] sm:$0xf]
      %v1240 = vld [vmem:[%s2 + $0x90] sm:$0xf]
      %v1241 = vld [vmem:[%s2 + $0x94] sm:$0xf]
      %v1242 = vld [vmem:[%s2 + $0x98] sm:$0xf]
      %v1243 = vld [vmem:[%s2 + $0x9c] sm:$0xf]
      %v1244 = vld [vmem:[%s2 + $0xa0] sm:$0xf]
      %v1245 = vld [vmem:[%s2 + $0xa4] sm:$0xf]
      %v1246 = vld [vmem:[%s2 + $0xa8] sm:$0xf]
      %v1247 = vld [vmem:[%s2 + $0xac] sm:$0xf]
      %v1248 = vld [vmem:[%s2 + $0xb0] sm:$0xf]
      %v1249 = vld [vmem:[%s2 + $0xb4] sm:$0xf]
      %v1250 = vld [vmem:[%s2 + $0xb8] sm:$0xf]
      %v1251 = vld [vmem:[%s2 + $0xbc] sm:$0xf]
      %v1252 = vunpack.c.l.b16 %v1207
      %v1253 = vunpack.c.l.b16 %v1211
      %v1254 = vunpack.c.l.b16 %v1215
      %v1255 = vunpack.c.l.b16 %v1219
      %v1256 = vunpack.c.l.b16 %v1223
      %v1257 = vunpack.c.l.b16 %v1227
      %v1258 = vunpack.c.l.b16 %v1231
      %v1259 = vunpack.c.l.b16 %v1235
      %v1260 = vpack.c.b16 %v1253, %v1252
      %v1261 = vpack.c.b16 %v1255, %v1254
      %v1262 = vpack.c.b16 %v1257, %v1256
      %v1263 = vpack.c.b16 %v1259, %v1258
      %v1284 = vunpack.c.l.b16 %v1236
      %v1285 = vunpack.c.l.b16 %v1237
      %v1286 = vunpack.c.l.b16 %v1238
      %v1287 = vunpack.c.l.b16 %v1239
      %v1288 = vunpack.c.l.b16 %v1240
      %v1289 = vunpack.c.l.b16 %v1241
      %v1290 = vunpack.c.l.b16 %v1242
      %v1291 = vunpack.c.l.b16 %v1243
      %v1292 = vunpack.c.l.b16 %v1244
      %v1293 = vunpack.c.l.b16 %v1245
      %v1294 = vunpack.c.l.b16 %v1246
      %v1295 = vunpack.c.l.b16 %v1247
      %v1296 = vunpack.c.l.b16 %v1248
      %v1297 = vunpack.c.l.b16 %v1249
      %v1298 = vunpack.c.l.b16 %v1250
      %v1299 = vunpack.c.l.b16 %v1251
      %v1300 = vpack.c.b16 %v1285, %v1284
      %v1301 = vpack.c.b16 %v1287, %v1286
      %v1302 = vpack.c.b16 %v1289, %v1288
      %v1303 = vpack.c.b16 %v1291, %v1290
      %v1304 = vpack.c.b16 %v1293, %v1292
      %v1305 = vpack.c.b16 %v1295, %v1294
      %v1306 = vpack.c.b16 %v1297, %v1296
      %v1307 = vpack.c.b16 %v1299, %v1298
      %1316 = vmatpush.bf16.msra.mxu0 %v1307
      %1317 = vmatpush.bf16.msra.mxu0 %v1306
      %1318 = vmatpush.bf16.msra.mxu0 %v1305
      %1319 = vmatpush.bf16.msra.mxu0 %v1304
      %1320 = vmatpush.bf16.msra.mxu0 %v1303
      %1321 = vmatpush.bf16.msra.mxu0 %v1302
      %1322 = vmatpush.bf16.msra.mxu0 %v1301
      %1323 = vmatpush.bf16.msra.mxu0 %v1300
      %1324 = vmatmul.bf16.gmra.mxu0 %v1260
      %v1325 = vpop.f32.mrf.mxu0
      %v1326 = vadd.f32 0.0, %v1325
      %v1327 = vpop.f32.mrf.mxu0
      %v1328 = vadd.f32 0.0, %v1327
      %1329 = vmatmul.bf16.gmra.mxu0 %v1261
      %v1330 = vpop.f32.mrf.mxu0
      %v1331 = vadd.f32 0.0, %v1330
      %v1332 = vpop.f32.mrf.mxu0
      %v1333 = vadd.f32 0.0, %v1332
      %1334 = vmatmul.bf16.gmra.mxu0 %v1262
      %v1335 = vpop.f32.mrf.mxu0
      %v1336 = vadd.f32 0.0, %v1335
      %v1337 = vpop.f32.mrf.mxu0
      %v1338 = vadd.f32 0.0, %v1337
      %1339 = vmatmul.bf16.gmra.mxu0 %v1263
      %v1340 = vpop.f32.mrf.mxu0
      %v1341 = vadd.f32 0.0, %v1340
      %v1342 = vpop.f32.mrf.mxu0
      %v1343 = vadd.f32 0.0, %v1342
      %1344 = vdwg.mxu0
      %v1345 = vadd.f32 %v1158, %v1326
      %v1346 = vadd.f32 %v1160, %v1328
      %v1347 = vadd.f32 %v1163, %v1331
      %v1348 = vadd.f32 %v1165, %v1333
      %v1349 = vadd.f32 %v1168, %v1336
      %v1350 = vadd.f32 %v1170, %v1338
      %v1351 = vadd.f32 %v1173, %v1341
      %v1352 = vadd.f32 %v1175, %v1343
      %s1353 = scalar_lea.vmem [#allocation2], 8
      %v1354 = vld [vmem:[%s1353] sm:$0xf]
      %v1355 = vld [vmem:[%s1353 + $0x8] sm:$0xf]
      %v1356 = vld [vmem:[%s1353 + $0x10] sm:$0xf]
      %v1357 = vld [vmem:[%s1353 + $0x18] sm:$0xf]
      %v1358 = vld [vmem:[%s1353 + $0x20] sm:$0xf]
      %v1359 = vld [vmem:[%s1353 + $0x28] sm:$0xf]
      %v1360 = vld [vmem:[%s1353 + $0x30] sm:$0xf]
      %v1361 = vld [vmem:[%s1353 + $0x38] sm:$0xf]
      %v1362 = vld [vmem:[%s2 + $0xc0] sm:$0xf]
      %v1363 = vld [vmem:[%s2 + $0xc4] sm:$0xf]
      %v1364 = vld [vmem:[%s2 + $0xc8] sm:$0xf]
      %v1365 = vld [vmem:[%s2 + $0xcc] sm:$0xf]
      %v1366 = vld [vmem:[%s2 + $0xd0] sm:$0xf]
      %v1367 = vld [vmem:[%s2 + $0xd4] sm:$0xf]
      %v1368 = vld [vmem:[%s2 + $0xd8] sm:$0xf]
      %v1369 = vld [vmem:[%s2 + $0xdc] sm:$0xf]
      %v1370 = vld [vmem:[%s2 + $0xe0] sm:$0xf]
      %v1371 = vld [vmem:[%s2 + $0xe4] sm:$0xf]
      %v1372 = vld [vmem:[%s2 + $0xe8] sm:$0xf]
      %v1373 = vld [vmem:[%s2 + $0xec] sm:$0xf]
      %v1374 = vld [vmem:[%s2 + $0xf0] sm:$0xf]
      %v1375 = vld [vmem:[%s2 + $0xf4] sm:$0xf]
      %v1376 = vld [vmem:[%s2 + $0xf8] sm:$0xf]
      %v1377 = vld [vmem:[%s2 + $0xfc] sm:$0xf]
      %v1386 = vunpack.c.l.b16 %v1354
      %v1387 = vunpack.c.l.b16 %v1355
      %v1388 = vunpack.c.l.b16 %v1356
      %v1389 = vunpack.c.l.b16 %v1357
      %v1390 = vunpack.c.l.b16 %v1358
      %v1391 = vunpack.c.l.b16 %v1359
      %v1392 = vunpack.c.l.b16 %v1360
      %v1393 = vunpack.c.l.b16 %v1361
      %v1394 = vpack.c.b16 %v1387, %v1386
      %v1395 = vpack.c.b16 %v1389, %v1388
      %v1396 = vpack.c.b16 %v1391, %v1390
      %v1397 = vpack.c.b16 %v1393, %v1392
      %v1418 = vunpack.c.l.b16 %v1362
      %v1419 = vunpack.c.l.b16 %v1363
      %v1420 = vunpack.c.l.b16 %v1364
      %v1421 = vunpack.c.l.b16 %v1365
      %v1422 = vunpack.c.l.b16 %v1366
      %v1423 = vunpack.c.l.b16 %v1367
      %v1424 = vunpack.c.l.b16 %v1368
      %v1425 = vunpack.c.l.b16 %v1369
      %v1426 = vunpack.c.l.b16 %v1370
      %v1427 = vunpack.c.l.b16 %v1371
      %v1428 = vunpack.c.l.b16 %v1372
      %v1429 = vunpack.c.l.b16 %v1373
      %v1430 = vunpack.c.l.b16 %v1374
      %v1431 = vunpack.c.l.b16 %v1375
      %v1432 = vunpack.c.l.b16 %v1376
      %v1433 = vunpack.c.l.b16 %v1377
      %v1434 = vpack.c.b16 %v1419, %v1418
      %v1435 = vpack.c.b16 %v1421, %v1420
      %v1436 = vpack.c.b16 %v1423, %v1422
      %v1437 = vpack.c.b16 %v1425, %v1424
      %v1438 = vpack.c.b16 %v1427, %v1426
      %v1439 = vpack.c.b16 %v1429, %v1428
      %v1440 = vpack.c.b16 %v1431, %v1430
      %v1441 = vpack.c.b16 %v1433, %v1432
      %1450 = vmatpush.bf16.msra.mxu0 %v1441
      %1451 = vmatpush.bf16.msra.mxu0 %v1440
      %1452 = vmatpush.bf16.msra.mxu0 %v1439
      %1453 = vmatpush.bf16.msra.mxu0 %v1438
      %1454 = vmatpush.bf16.msra.mxu0 %v1437
      %1455 = vmatpush.bf16.msra.mxu0 %v1436
      %1456 = vmatpush.bf16.msra.mxu0 %v1435
      %1457 = vmatpush.bf16.msra.mxu0 %v1434
      %1458 = vmatmul.bf16.gmra.mxu0 %v1394
      %v1459 = vpop.f32.mrf.mxu0
      %v1460 = vadd.f32 0.0, %v1459
      %v1461 = vpop.f32.mrf.mxu0
      %v1462 = vadd.f32 0.0, %v1461
      %1463 = vmatmul.bf16.gmra.mxu0 %v1395
      %v1464 = vpop.f32.mrf.mxu0
      %v1465 = vadd.f32 0.0, %v1464
      %v1466 = vpop.f32.mrf.mxu0
      %v1467 = vadd.f32 0.0, %v1466
      %1468 = vmatmul.bf16.gmra.mxu0 %v1396
      %v1469 = vpop.f32.mrf.mxu0
      %v1470 = vadd.f32 0.0, %v1469
      %v1471 = vpop.f32.mrf.mxu0
      %v1472 = vadd.f32 0.0, %v1471
      %1473 = vmatmul.bf16.gmra.mxu0 %v1397
      %v1474 = vpop.f32.mrf.mxu0
      %v1475 = vadd.f32 0.0, %v1474
      %v1476 = vpop.f32.mrf.mxu0
      %v1477 = vadd.f32 0.0, %v1476
      %1478 = vdwg.mxu0
      %v1479 = vadd.f32 %v1345, %v1460
      %v1480 = vadd.f32 %v1346, %v1462
      %v1481 = vadd.f32 %v1347, %v1465
      %v1482 = vadd.f32 %v1348, %v1467
      %v1483 = vadd.f32 %v1349, %v1470
      %v1484 = vadd.f32 %v1350, %v1472
      %v1485 = vadd.f32 %v1351, %v1475
      %v1486 = vadd.f32 %v1352, %v1477
      %v1487 = vld [vmem:[%s1353] sm:$0xf]
      %v1488 = vld [vmem:[%s1353 + $0x4] sm:$0x1]
      %v1489 = vld [vmem:[%s1353 + $0x8] sm:$0xf]
      %v1490 = vld [vmem:[%s1353 + $0xc] sm:$0x1]
      %v1491 = vld [vmem:[%s1353 + $0x10] sm:$0xf]
      %v1492 = vld [vmem:[%s1353 + $0x14] sm:$0x1]
      %v1493 = vld [vmem:[%s1353 + $0x18] sm:$0xf]
      %v1494 = vld [vmem:[%s1353 + $0x1c] sm:$0x1]
      %v1495 = vld [vmem:[%s1353 + $0x20] sm:$0xf]
      %v1496 = vld [vmem:[%s1353 + $0x24] sm:$0x1]
      %v1497 = vld [vmem:[%s1353 + $0x28] sm:$0xf]
      %v1498 = vld [vmem:[%s1353 + $0x2c] sm:$0x1]
      %v1499 = vld [vmem:[%s1353 + $0x30] sm:$0xf]
      %v1500 = vld [vmem:[%s1353 + $0x34] sm:$0x1]
      %v1501 = vld [vmem:[%s1353 + $0x38] sm:$0xf]
      %v1502 = vld [vmem:[%s1353 + $0x3c] sm:$0x1]
      %v1504 = vshrl.u32 %v1487, 16
      %v1506 = vrot.slane %v1504, 4
      %v1507 = vshll.u32 %v1487, 16
      %v1509 = vrot.slane %v1507, 5
      %v1510 = vor.u32 %v1506, %v1509
      %v1511 = vrot.slane %v1510, 4
      %v1513 = vshll.u32 %v1488, 16
      %v1515 = vrot.slane %v1513, 5
      %v1516 = vsel %vm854, %v1511, %v1515
      %v1518 = vshrl.u32 %v1489, 16
      %v1520 = vrot.slane %v1518, 4
      %v1521 = vshll.u32 %v1489, 16
      %v1523 = vrot.slane %v1521, 5
      %v1524 = vor.u32 %v1520, %v1523
      %v1525 = vrot.slane %v1524, 4
      %v1527 = vshll.u32 %v1490, 16
      %v1529 = vrot.slane %v1527, 5
      %v1530 = vsel %vm854, %v1525, %v1529
      %v1532 = vshrl.u32 %v1491, 16
      %v1534 = vrot.slane %v1532, 4
      %v1535 = vshll.u32 %v1491, 16
      %v1537 = vrot.slane %v1535, 5
      %v1538 = vor.u32 %v1534, %v1537
      %v1539 = vrot.slane %v1538, 4
      %v1541 = vshll.u32 %v1492, 16
      %v1543 = vrot.slane %v1541, 5
      %v1544 = vsel %vm854, %v1539, %v1543
      %v1546 = vshrl.u32 %v1493, 16
      %v1548 = vrot.slane %v1546, 4
      %v1549 = vshll.u32 %v1493, 16
      %v1551 = vrot.slane %v1549, 5
      %v1552 = vor.u32 %v1548, %v1551
      %v1553 = vrot.slane %v1552, 4
      %v1555 = vshll.u32 %v1494, 16
      %v1557 = vrot.slane %v1555, 5
      %v1558 = vsel %vm854, %v1553, %v1557
      %v1560 = vshrl.u32 %v1495, 16
      %v1562 = vrot.slane %v1560, 4
      %v1563 = vshll.u32 %v1495, 16
      %v1565 = vrot.slane %v1563, 5
      %v1566 = vor.u32 %v1562, %v1565
      %v1567 = vrot.slane %v1566, 4
      %v1569 = vshll.u32 %v1496, 16
      %v1571 = vrot.slane %v1569, 5
      %v1572 = vsel %vm854, %v1567, %v1571
      %v1574 = vshrl.u32 %v1497, 16
      %v1576 = vrot.slane %v1574, 4
      %v1577 = vshll.u32 %v1497, 16
      %v1579 = vrot.slane %v1577, 5
      %v1580 = vor.u32 %v1576, %v1579
      %v1581 = vrot.slane %v1580, 4
      %v1583 = vshll.u32 %v1498, 16
      %v1585 = vrot.slane %v1583, 5
      %v1586 = vsel %vm854, %v1581, %v1585
      %v1588 = vshrl.u32 %v1499, 16
      %v1590 = vrot.slane %v1588, 4
      %v1591 = vshll.u32 %v1499, 16
      %v1593 = vrot.slane %v1591, 5
      %v1594 = vor.u32 %v1590, %v1593
      %v1595 = vrot.slane %v1594, 4
      %v1597 = vshll.u32 %v1500, 16
      %v1599 = vrot.slane %v1597, 5
      %v1600 = vsel %vm854, %v1595, %v1599
      %v1602 = vshrl.u32 %v1501, 16
      %v1604 = vrot.slane %v1602, 4
      %v1605 = vshll.u32 %v1501, 16
      %v1607 = vrot.slane %v1605, 5
      %v1608 = vor.u32 %v1604, %v1607
      %v1609 = vrot.slane %v1608, 4
      %v1611 = vshll.u32 %v1502, 16
      %v1613 = vrot.slane %v1611, 5
      %v1614 = vsel %vm854, %v1609, %v1613
      %v1615 = vld [vmem:[%s2 + $0x100] sm:$0xf]
      %v1616 = vld [vmem:[%s2 + $0x104] sm:$0xf]
      %v1617 = vld [vmem:[%s2 + $0x108] sm:$0xf]
      %v1618 = vld [vmem:[%s2 + $0x10c] sm:$0xf]
      %v1619 = vld [vmem:[%s2 + $0x110] sm:$0xf]
      %v1620 = vld [vmem:[%s2 + $0x114] sm:$0xf]
      %v1621 = vld [vmem:[%s2 + $0x118] sm:$0xf]
      %v1622 = vld [vmem:[%s2 + $0x11c] sm:$0xf]
      %v1623 = vld [vmem:[%s2 + $0x120] sm:$0xf]
      %v1624 = vld [vmem:[%s2 + $0x124] sm:$0xf]
      %v1625 = vld [vmem:[%s2 + $0x128] sm:$0xf]
      %v1626 = vld [vmem:[%s2 + $0x12c] sm:$0xf]
      %v1627 = vld [vmem:[%s2 + $0x130] sm:$0xf]
      %v1628 = vld [vmem:[%s2 + $0x134] sm:$0xf]
      %v1629 = vld [vmem:[%s2 + $0x138] sm:$0xf]
      %v1630 = vld [vmem:[%s2 + $0x13c] sm:$0xf]
      %v1631 = vunpack.c.l.b16 %v1516
      %v1632 = vunpack.c.l.b16 %v1530
      %v1633 = vunpack.c.l.b16 %v1544
      %v1634 = vunpack.c.l.b16 %v1558
      %v1635 = vunpack.c.l.b16 %v1572
      %v1636 = vunpack.c.l.b16 %v1586
      %v1637 = vunpack.c.l.b16 %v1600
      %v1638 = vunpack.c.l.b16 %v1614
      %v1639 = vpack.c.b16 %v1632, %v1631
      %v1640 = vpack.c.b16 %v1634, %v1633
      %v1641 = vpack.c.b16 %v1636, %v1635
      %v1642 = vpack.c.b16 %v1638, %v1637
      %v1663 = vunpack.c.l.b16 %v1615
      %v1664 = vunpack.c.l.b16 %v1616
      %v1665 = vunpack.c.l.b16 %v1617
      %v1666 = vunpack.c.l.b16 %v1618
      %v1667 = vunpack.c.l.b16 %v1619
      %v1668 = vunpack.c.l.b16 %v1620
      %v1669 = vunpack.c.l.b16 %v1621
      %v1670 = vunpack.c.l.b16 %v1622
      %v1671 = vunpack.c.l.b16 %v1623
      %v1672 = vunpack.c.l.b16 %v1624
      %v1673 = vunpack.c.l.b16 %v1625
      %v1674 = vunpack.c.l.b16 %v1626
      %v1675 = vunpack.c.l.b16 %v1627
      %v1676 = vunpack.c.l.b16 %v1628
      %v1677 = vunpack.c.l.b16 %v1629
      %v1678 = vunpack.c.l.b16 %v1630
      %v1679 = vpack.c.b16 %v1664, %v1663
      %v1680 = vpack.c.b16 %v1666, %v1665
      %v1681 = vpack.c.b16 %v1668, %v1667
      %v1682 = vpack.c.b16 %v1670, %v1669
      %v1683 = vpack.c.b16 %v1672, %v1671
      %v1684 = vpack.c.b16 %v1674, %v1673
      %v1685 = vpack.c.b16 %v1676, %v1675
      %v1686 = vpack.c.b16 %v1678, %v1677
      %1695 = vmatpush.bf16.msra.mxu0 %v1686
      %1696 = vmatpush.bf16.msra.mxu0 %v1685
      %1697 = vmatpush.bf16.msra.mxu0 %v1684
      %1698 = vmatpush.bf16.msra.mxu0 %v1683
      %1699 = vmatpush.bf16.msra.mxu0 %v1682
      %1700 = vmatpush.bf16.msra.mxu0 %v1681
      %1701 = vmatpush.bf16.msra.mxu0 %v1680
      %1702 = vmatpush.bf16.msra.mxu0 %v1679
      %1703 = vmatmul.bf16.gmra.mxu0 %v1639
      %v1704 = vpop.f32.mrf.mxu0
      %v1705 = vadd.f32 0.0, %v1704
      %v1706 = vpop.f32.mrf.mxu0
      %v1707 = vadd.f32 0.0, %v1706
      %1708 = vmatmul.bf16.gmra.mxu0 %v1640
      %v1709 = vpop.f32.mrf.mxu0
      %v1710 = vadd.f32 0.0, %v1709
      %v1711 = vpop.f32.mrf.mxu0
      %v1712 = vadd.f32 0.0, %v1711
      %1713 = vmatmul.bf16.gmra.mxu0 %v1641
      %v1714 = vpop.f32.mrf.mxu0
      %v1715 = vadd.f32 0.0, %v1714
      %v1716 = vpop.f32.mrf.mxu0
      %v1717 = vadd.f32 0.0, %v1716
      %1718 = vmatmul.bf16.gmra.mxu0 %v1642
      %v1719 = vpop.f32.mrf.mxu0
      %v1720 = vadd.f32 0.0, %v1719
      %v1721 = vpop.f32.mrf.mxu0
      %v1722 = vadd.f32 0.0, %v1721
      %1723 = vdwg.mxu0
      %v1724 = vadd.f32 %v1479, %v1705
      %v1725 = vadd.f32 %v1480, %v1707
      %v1726 = vadd.f32 %v1481, %v1710
      %v1727 = vadd.f32 %v1482, %v1712
      %v1728 = vadd.f32 %v1483, %v1715
      %v1729 = vadd.f32 %v1484, %v1717
      %v1730 = vadd.f32 %v1485, %v1720
      %v1731 = vadd.f32 %v1486, %v1722
      %v1732 = vld [vmem:[%s1353] sm:$0xe]
      %v1733 = vld [vmem:[%s1353 + $0x8] sm:$0xe]
      %v1734 = vld [vmem:[%s1353 + $0x10] sm:$0xe]
      %v1735 = vld [vmem:[%s1353 + $0x18] sm:$0xe]
      %v1736 = vld [vmem:[%s1353 + $0x20] sm:$0xe]
      %v1737 = vld [vmem:[%s1353 + $0x28] sm:$0xe]
      %v1738 = vld [vmem:[%s1353 + $0x30] sm:$0xe]
      %v1739 = vld [vmem:[%s1353 + $0x38] sm:$0xe]
      %v1756 = vrot.slane %v1732, 5
      %v1757 = vrot.slane %v1756, 4
      %v1758 = vrot.slane %v1488, 5
      %v1759 = vsel %vm1203, %v1757, %v1758
      %v1760 = vrot.slane %v1733, 5
      %v1761 = vrot.slane %v1760, 4
      %v1762 = vrot.slane %v1490, 5
      %v1763 = vsel %vm1203, %v1761, %v1762
      %v1764 = vrot.slane %v1734, 5
      %v1765 = vrot.slane %v1764, 4
      %v1766 = vrot.slane %v1492, 5
      %v1767 = vsel %vm1203, %v1765, %v1766
      %v1768 = vrot.slane %v1735, 5
      %v1769 = vrot.slane %v1768, 4
      %v1770 = vrot.slane %v1494, 5
      %v1771 = vsel %vm1203, %v1769, %v1770
      %v1772 = vrot.slane %v1736, 5
      %v1773 = vrot.slane %v1772, 4
      %v1774 = vrot.slane %v1496, 5
      %v1775 = vsel %vm1203, %v1773, %v1774
      %v1776 = vrot.slane %v1737, 5
      %v1777 = vrot.slane %v1776, 4
      %v1778 = vrot.slane %v1498, 5
      %v1779 = vsel %vm1203, %v1777, %v1778
      %v1780 = vrot.slane %v1738, 5
      %v1781 = vrot.slane %v1780, 4
      %v1782 = vrot.slane %v1500, 5
      %v1783 = vsel %vm1203, %v1781, %v1782
      %v1784 = vrot.slane %v1739, 5
      %v1785 = vrot.slane %v1784, 4
      %v1786 = vrot.slane %v1502, 5
      %v1787 = vsel %vm1203, %v1785, %v1786
      %v1788 = vld [vmem:[%s2 + $0x140] sm:$0xf]
      %v1789 = vld [vmem:[%s2 + $0x144] sm:$0xf]
      %v1790 = vld [vmem:[%s2 + $0x148] sm:$0xf]
      %v1791 = vld [vmem:[%s2 + $0x14c] sm:$0xf]
      %v1792 = vld [vmem:[%s2 + $0x150] sm:$0xf]
      %v1793 = vld [vmem:[%s2 + $0x154] sm:$0xf]
      %v1794 = vld [vmem:[%s2 + $0x158] sm:$0xf]
      %v1795 = vld [vmem:[%s2 + $0x15c] sm:$0xf]
      %v1796 = vld [vmem:[%s2 + $0x160] sm:$0xf]
      %v1797 = vld [vmem:[%s2 + $0x164] sm:$0xf]
      %v1798 = vld [vmem:[%s2 + $0x168] sm:$0xf]
      %v1799 = vld [vmem:[%s2 + $0x16c] sm:$0xf]
      %v1800 = vld [vmem:[%s2 + $0x170] sm:$0xf]
      %v1801 = vld [vmem:[%s2 + $0x174] sm:$0xf]
      %v1802 = vld [vmem:[%s2 + $0x178] sm:$0xf]
      %v1803 = vld [vmem:[%s2 + $0x17c] sm:$0xf]
      %v1804 = vunpack.c.l.b16 %v1759
      %v1805 = vunpack.c.l.b16 %v1763
      %v1806 = vunpack.c.l.b16 %v1767
      %v1807 = vunpack.c.l.b16 %v1771
      %v1808 = vunpack.c.l.b16 %v1775
      %v1809 = vunpack.c.l.b16 %v1779
      %v1810 = vunpack.c.l.b16 %v1783
      %v1811 = vunpack.c.l.b16 %v1787
      %v1812 = vpack.c.b16 %v1805, %v1804
      %v1813 = vpack.c.b16 %v1807, %v1806
      %v1814 = vpack.c.b16 %v1809, %v1808
      %v1815 = vpack.c.b16 %v1811, %v1810
      %v1836 = vunpack.c.l.b16 %v1788
      %v1837 = vunpack.c.l.b16 %v1789
      %v1838 = vunpack.c.l.b16 %v1790
      %v1839 = vunpack.c.l.b16 %v1791
      %v1840 = vunpack.c.l.b16 %v1792
      %v1841 = vunpack.c.l.b16 %v1793
      %v1842 = vunpack.c.l.b16 %v1794
      %v1843 = vunpack.c.l.b16 %v1795
      %v1844 = vunpack.c.l.b16 %v1796
      %v1845 = vunpack.c.l.b16 %v1797
      %v1846 = vunpack.c.l.b16 %v1798
      %v1847 = vunpack.c.l.b16 %v1799
      %v1848 = vunpack.c.l.b16 %v1800
      %v1849 = vunpack.c.l.b16 %v1801
      %v1850 = vunpack.c.l.b16 %v1802
      %v1851 = vunpack.c.l.b16 %v1803
      %v1852 = vpack.c.b16 %v1837, %v1836
      %v1853 = vpack.c.b16 %v1839, %v1838
      %v1854 = vpack.c.b16 %v1841, %v1840
      %v1855 = vpack.c.b16 %v1843, %v1842
      %v1856 = vpack.c.b16 %v1845, %v1844
      %v1857 = vpack.c.b16 %v1847, %v1846
      %v1858 = vpack.c.b16 %v1849, %v1848
      %v1859 = vpack.c.b16 %v1851, %v1850
      %1868 = vmatpush.bf16.msra.mxu0 %v1859
      %1869 = vmatpush.bf16.msra.mxu0 %v1858
      %1870 = vmatpush.bf16.msra.mxu0 %v1857
      %1871 = vmatpush.bf16.msra.mxu0 %v1856
      %1872 = vmatpush.bf16.msra.mxu0 %v1855
      %1873 = vmatpush.bf16.msra.mxu0 %v1854
      %1874 = vmatpush.bf16.msra.mxu0 %v1853
      %1875 = vmatpush.bf16.msra.mxu0 %v1852
      %1876 = vmatmul.bf16.gmra.mxu0 %v1812
      %v1877 = vpop.f32.mrf.mxu0
      %v1878 = vadd.f32 0.0, %v1877
      %v1879 = vpop.f32.mrf.mxu0
      %v1880 = vadd.f32 0.0, %v1879
      %1881 = vmatmul.bf16.gmra.mxu0 %v1813
      %v1882 = vpop.f32.mrf.mxu0
      %v1883 = vadd.f32 0.0, %v1882
      %v1884 = vpop.f32.mrf.mxu0
      %v1885 = vadd.f32 0.0, %v1884
      %1886 = vmatmul.bf16.gmra.mxu0 %v1814
      %v1887 = vpop.f32.mrf.mxu0
      %v1888 = vadd.f32 0.0, %v1887
      %v1889 = vpop.f32.mrf.mxu0
      %v1890 = vadd.f32 0.0, %v1889
      %1891 = vmatmul.bf16.gmra.mxu0 %v1815
      %v1892 = vpop.f32.mrf.mxu0
      %v1893 = vadd.f32 0.0, %v1892
      %v1894 = vpop.f32.mrf.mxu0
      %v1895 = vadd.f32 0.0, %v1894
      %1896 = vdwg.mxu0
      %v1897 = vadd.f32 %v1724, %v1878
      %v1898 = vadd.f32 %v1725, %v1880
      %v1899 = vadd.f32 %v1726, %v1883
      %v1900 = vadd.f32 %v1727, %v1885
      %v1901 = vadd.f32 %v1728, %v1888
      %v1902 = vadd.f32 %v1729, %v1890
      %v1903 = vadd.f32 %v1730, %v1893
      %v1904 = vadd.f32 %v1731, %v1895
      %s1905 = scalar_lea.vmem [#allocation2], 16
      %v1906 = vld [vmem:[%s1905] sm:$0xf]
      %v1907 = vld [vmem:[%s1905 + $0x8] sm:$0xf]
      %v1908 = vld [vmem:[%s1905 + $0x10] sm:$0xf]
      %v1909 = vld [vmem:[%s1905 + $0x18] sm:$0xf]
      %v1910 = vld [vmem:[%s1905 + $0x20] sm:$0xf]
      %v1911 = vld [vmem:[%s1905 + $0x28] sm:$0xf]
      %v1912 = vld [vmem:[%s1905 + $0x30] sm:$0xf]
      %v1913 = vld [vmem:[%s1905 + $0x38] sm:$0xf]
      %v1914 = vld [vmem:[%s2 + $0x180] sm:$0xf]
      %v1915 = vld [vmem:[%s2 + $0x184] sm:$0xf]
      %v1916 = vld [vmem:[%s2 + $0x188] sm:$0xf]
      %v1917 = vld [vmem:[%s2 + $0x18c] sm:$0xf]
      %v1918 = vld [vmem:[%s2 + $0x190] sm:$0xf]
      %v1919 = vld [vmem:[%s2 + $0x194] sm:$0xf]
      %v1920 = vld [vmem:[%s2 + $0x198] sm:$0xf]
      %v1921 = vld [vmem:[%s2 + $0x19c] sm:$0xf]
      %v1922 = vld [vmem:[%s2 + $0x1a0] sm:$0xf]
      %v1923 = vld [vmem:[%s2 + $0x1a4] sm:$0xf]
      %v1924 = vld [vmem:[%s2 + $0x1a8] sm:$0xf]
      %v1925 = vld [vmem:[%s2 + $0x1ac] sm:$0xf]
      %v1926 = vld [vmem:[%s2 + $0x1b0] sm:$0xf]
      %v1927 = vld [vmem:[%s2 + $0x1b4] sm:$0xf]
      %v1928 = vld [vmem:[%s2 + $0x1b8] sm:$0xf]
      %v1929 = vld [vmem:[%s2 + $0x1bc] sm:$0xf]
      %v1938 = vunpack.c.l.b16 %v1906
      %v1939 = vunpack.c.l.b16 %v1907
      %v1940 = vunpack.c.l.b16 %v1908
      %v1941 = vunpack.c.l.b16 %v1909
      %v1942 = vunpack.c.l.b16 %v1910
      %v1943 = vunpack.c.l.b16 %v1911
      %v1944 = vunpack.c.l.b16 %v1912
      %v1945 = vunpack.c.l.b16 %v1913
      %v1946 = vpack.c.b16 %v1939, %v1938
      %v1947 = vpack.c.b16 %v1941, %v1940
      %v1948 = vpack.c.b16 %v1943, %v1942
      %v1949 = vpack.c.b16 %v1945, %v1944
      %v1970 = vunpack.c.l.b16 %v1914
      %v1971 = vunpack.c.l.b16 %v1915
      %v1972 = vunpack.c.l.b16 %v1916
      %v1973 = vunpack.c.l.b16 %v1917
      %v1974 = vunpack.c.l.b16 %v1918
      %v1975 = vunpack.c.l.b16 %v1919
      %v1976 = vunpack.c.l.b16 %v1920
      %v1977 = vunpack.c.l.b16 %v1921
      %v1978 = vunpack.c.l.b16 %v1922
      %v1979 = vunpack.c.l.b16 %v1923
      %v1980 = vunpack.c.l.b16 %v1924
      %v1981 = vunpack.c.l.b16 %v1925
      %v1982 = vunpack.c.l.b16 %v1926
      %v1983 = vunpack.c.l.b16 %v1927
      %v1984 = vunpack.c.l.b16 %v1928
      %v1985 = vunpack.c.l.b16 %v1929
      %v1986 = vpack.c.b16 %v1971, %v1970
      %v1987 = vpack.c.b16 %v1973, %v1972
      %v1988 = vpack.c.b16 %v1975, %v1974
      %v1989 = vpack.c.b16 %v1977, %v1976
      %v1990 = vpack.c.b16 %v1979, %v1978
      %v1991 = vpack.c.b16 %v1981, %v1980
      %v1992 = vpack.c.b16 %v1983, %v1982
      %v1993 = vpack.c.b16 %v1985, %v1984
      %2002 = vmatpush.bf16.msra.mxu0 %v1993
      %2003 = vmatpush.bf16.msra.mxu0 %v1992
      %2004 = vmatpush.bf16.msra.mxu0 %v1991
      %2005 = vmatpush.bf16.msra.mxu0 %v1990
      %2006 = vmatpush.bf16.msra.mxu0 %v1989
      %2007 = vmatpush.bf16.msra.mxu0 %v1988
      %2008 = vmatpush.bf16.msra.mxu0 %v1987
      %2009 = vmatpush.bf16.msra.mxu0 %v1986
      %2010 = vmatmul.bf16.gmra.mxu0 %v1946
      %v2011 = vpop.f32.mrf.mxu0
      %v2012 = vadd.f32 0.0, %v2011
      %v2013 = vpop.f32.mrf.mxu0
      %v2014 = vadd.f32 0.0, %v2013
      %2015 = vmatmul.bf16.gmra.mxu0 %v1947
      %v2016 = vpop.f32.mrf.mxu0
      %v2017 = vadd.f32 0.0, %v2016
      %v2018 = vpop.f32.mrf.mxu0
      %v2019 = vadd.f32 0.0, %v2018
      %2020 = vmatmul.bf16.gmra.mxu0 %v1948
      %v2021 = vpop.f32.mrf.mxu0
      %v2022 = vadd.f32 0.0, %v2021
      %v2023 = vpop.f32.mrf.mxu0
      %v2024 = vadd.f32 0.0, %v2023
      %2025 = vmatmul.bf16.gmra.mxu0 %v1949
      %v2026 = vpop.f32.mrf.mxu0
      %v2027 = vadd.f32 0.0, %v2026
      %v2028 = vpop.f32.mrf.mxu0
      %v2029 = vadd.f32 0.0, %v2028
      %2030 = vdwg.mxu0
      %v2031 = vadd.f32 %v1897, %v2012
      %v2032 = vadd.f32 %v1898, %v2014
      %v2033 = vadd.f32 %v1899, %v2017
      %v2034 = vadd.f32 %v1900, %v2019
      %v2035 = vadd.f32 %v1901, %v2022
      %v2036 = vadd.f32 %v1902, %v2024
      %v2037 = vadd.f32 %v1903, %v2027
      %v2038 = vadd.f32 %v1904, %v2029
      %v2039 = vld [vmem:[%s1905] sm:$0xf]
      %v2040 = vld [vmem:[%s1905 + $0x4] sm:$0x1]
      %v2041 = vld [vmem:[%s1905 + $0x8] sm:$0xf]
      %v2042 = vld [vmem:[%s1905 + $0xc] sm:$0x1]
      %v2043 = vld [vmem:[%s1905 + $0x10] sm:$0xf]
      %v2044 = vld [vmem:[%s1905 + $0x14] sm:$0x1]
      %v2045 = vld [vmem:[%s1905 + $0x18] sm:$0xf]
      %v2046 = vld [vmem:[%s1905 + $0x1c] sm:$0x1]
      %v2047 = vld [vmem:[%s1905 + $0x20] sm:$0xf]
      %v2048 = vld [vmem:[%s1905 + $0x24] sm:$0x1]
      %v2049 = vld [vmem:[%s1905 + $0x28] sm:$0xf]
      %v2050 = vld [vmem:[%s1905 + $0x2c] sm:$0x1]
      %v2051 = vld [vmem:[%s1905 + $0x30] sm:$0xf]
      %v2052 = vld [vmem:[%s1905 + $0x34] sm:$0x1]
      %v2053 = vld [vmem:[%s1905 + $0x38] sm:$0xf]
      %v2054 = vld [vmem:[%s1905 + $0x3c] sm:$0x1]
      %v2056 = vshrl.u32 %v2039, 16
      %v2058 = vrot.slane %v2056, 4
      %v2059 = vshll.u32 %v2039, 16
      %v2061 = vrot.slane %v2059, 5
      %v2062 = vor.u32 %v2058, %v2061
      %v2063 = vrot.slane %v2062, 4
      %v2065 = vshll.u32 %v2040, 16
      %v2067 = vrot.slane %v2065, 5
      %v2068 = vsel %vm854, %v2063, %v2067
      %v2070 = vshrl.u32 %v2041, 16
      %v2072 = vrot.slane %v2070, 4
      %v2073 = vshll.u32 %v2041, 16
      %v2075 = vrot.slane %v2073, 5
      %v2076 = vor.u32 %v2072, %v2075
      %v2077 = vrot.slane %v2076, 4
      %v2079 = vshll.u32 %v2042, 16
      %v2081 = vrot.slane %v2079, 5
      %v2082 = vsel %vm854, %v2077, %v2081
      %v2084 = vshrl.u32 %v2043, 16
      %v2086 = vrot.slane %v2084, 4
      %v2087 = vshll.u32 %v2043, 16
      %v2089 = vrot.slane %v2087, 5
      %v2090 = vor.u32 %v2086, %v2089
      %v2091 = vrot.slane %v2090, 4
      %v2093 = vshll.u32 %v2044, 16
      %v2095 = vrot.slane %v2093, 5
      %v2096 = vsel %vm854, %v2091, %v2095
      %v2098 = vshrl.u32 %v2045, 16
      %v2100 = vrot.slane %v2098, 4
      %v2101 = vshll.u32 %v2045, 16
      %v2103 = vrot.slane %v2101, 5
      %v2104 = vor.u32 %v2100, %v2103
      %v2105 = vrot.slane %v2104, 4
      %v2107 = vshll.u32 %v2046, 16
      %v2109 = vrot.slane %v2107, 5
      %v2110 = vsel %vm854, %v2105, %v2109
      %v2112 = vshrl.u32 %v2047, 16
      %v2114 = vrot.slane %v2112, 4
      %v2115 = vshll.u32 %v2047, 16
      %v2117 = vrot.slane %v2115, 5
      %v2118 = vor.u32 %v2114, %v2117
      %v2119 = vrot.slane %v2118, 4
      %v2121 = vshll.u32 %v2048, 16
      %v2123 = vrot.slane %v2121, 5
      %v2124 = vsel %vm854, %v2119, %v2123
      %v2126 = vshrl.u32 %v2049, 16
      %v2128 = vrot.slane %v2126, 4
      %v2129 = vshll.u32 %v2049, 16
      %v2131 = vrot.slane %v2129, 5
      %v2132 = vor.u32 %v2128, %v2131
      %v2133 = vrot.slane %v2132, 4
      %v2135 = vshll.u32 %v2050, 16
      %v2137 = vrot.slane %v2135, 5
      %v2138 = vsel %vm854, %v2133, %v2137
      %v2140 = vshrl.u32 %v2051, 16
      %v2142 = vrot.slane %v2140, 4
      %v2143 = vshll.u32 %v2051, 16
      %v2145 = vrot.slane %v2143, 5
      %v2146 = vor.u32 %v2142, %v2145
      %v2147 = vrot.slane %v2146, 4
      %v2149 = vshll.u32 %v2052, 16
      %v2151 = vrot.slane %v2149, 5
      %v2152 = vsel %vm854, %v2147, %v2151
      %v2154 = vshrl.u32 %v2053, 16
      %v2156 = vrot.slane %v2154, 4
      %v2157 = vshll.u32 %v2053, 16
      %v2159 = vrot.slane %v2157, 5
      %v2160 = vor.u32 %v2156, %v2159
      %v2161 = vrot.slane %v2160, 4
      %v2163 = vshll.u32 %v2054, 16
      %v2165 = vrot.slane %v2163, 5
      %v2166 = vsel %vm854, %v2161, %v2165
      %v2167 = vld [vmem:[%s2 + $0x1c0] sm:$0xf]
      %v2168 = vld [vmem:[%s2 + $0x1c4] sm:$0xf]
      %v2169 = vld [vmem:[%s2 + $0x1c8] sm:$0xf]
      %v2170 = vld [vmem:[%s2 + $0x1cc] sm:$0xf]
      %v2171 = vld [vmem:[%s2 + $0x1d0] sm:$0xf]
      %v2172 = vld [vmem:[%s2 + $0x1d4] sm:$0xf]
      %v2173 = vld [vmem:[%s2 + $0x1d8] sm:$0xf]
      %v2174 = vld [vmem:[%s2 + $0x1dc] sm:$0xf]
      %v2175 = vld [vmem:[%s2 + $0x1e0] sm:$0xf]
      %v2176 = vld [vmem:[%s2 + $0x1e4] sm:$0xf]
      %v2177 = vld [vmem:[%s2 + $0x1e8] sm:$0xf]
      %v2178 = vld [vmem:[%s2 + $0x1ec] sm:$0xf]
      %v2179 = vld [vmem:[%s2 + $0x1f0] sm:$0xf]
      %v2180 = vld [vmem:[%s2 + $0x1f4] sm:$0xf]
      %v2181 = vld [vmem:[%s2 + $0x1f8] sm:$0xf]
      %v2182 = vld [vmem:[%s2 + $0x1fc] sm:$0xf]
      %v2183 = vunpack.c.l.b16 %v2068
      %v2184 = vunpack.c.l.b16 %v2082
      %v2185 = vunpack.c.l.b16 %v2096
      %v2186 = vunpack.c.l.b16 %v2110
      %v2187 = vunpack.c.l.b16 %v2124
      %v2188 = vunpack.c.l.b16 %v2138
      %v2189 = vunpack.c.l.b16 %v2152
      %v2190 = vunpack.c.l.b16 %v2166
      %v2191 = vpack.c.b16 %v2184, %v2183
      %v2192 = vpack.c.b16 %v2186, %v2185
      %v2193 = vpack.c.b16 %v2188, %v2187
      %v2194 = vpack.c.b16 %v2190, %v2189
      %v2215 = vunpack.c.l.b16 %v2167
      %v2216 = vunpack.c.l.b16 %v2168
      %v2217 = vunpack.c.l.b16 %v2169
      %v2218 = vunpack.c.l.b16 %v2170
      %v2219 = vunpack.c.l.b16 %v2171
      %v2220 = vunpack.c.l.b16 %v2172
      %v2221 = vunpack.c.l.b16 %v2173
      %v2222 = vunpack.c.l.b16 %v2174
      %v2223 = vunpack.c.l.b16 %v2175
      %v2224 = vunpack.c.l.b16 %v2176
      %v2225 = vunpack.c.l.b16 %v2177
      %v2226 = vunpack.c.l.b16 %v2178
      %v2227 = vunpack.c.l.b16 %v2179
      %v2228 = vunpack.c.l.b16 %v2180
      %v2229 = vunpack.c.l.b16 %v2181
      %v2230 = vunpack.c.l.b16 %v2182
      %v2231 = vpack.c.b16 %v2216, %v2215
      %v2232 = vpack.c.b16 %v2218, %v2217
      %v2233 = vpack.c.b16 %v2220, %v2219
      %v2234 = vpack.c.b16 %v2222, %v2221
      %v2235 = vpack.c.b16 %v2224, %v2223
      %v2236 = vpack.c.b16 %v2226, %v2225
      %v2237 = vpack.c.b16 %v2228, %v2227
      %v2238 = vpack.c.b16 %v2230, %v2229
      %2247 = vmatpush.bf16.msra.mxu0 %v2238
      %2248 = vmatpush.bf16.msra.mxu0 %v2237
      %2249 = vmatpush.bf16.msra.mxu0 %v2236
      %2250 = vmatpush.bf16.msra.mxu0 %v2235
      %2251 = vmatpush.bf16.msra.mxu0 %v2234
      %2252 = vmatpush.bf16.msra.mxu0 %v2233
      %2253 = vmatpush.bf16.msra.mxu0 %v2232
      %2254 = vmatpush.bf16.msra.mxu0 %v2231
      %2255 = vmatmul.bf16.gmra.mxu0 %v2191
      %v2256 = vpop.f32.mrf.mxu0
      %v2257 = vadd.f32 0.0, %v2256
      %v2258 = vpop.f32.mrf.mxu0
      %v2259 = vadd.f32 0.0, %v2258
      %2260 = vmatmul.bf16.gmra.mxu0 %v2192
      %v2261 = vpop.f32.mrf.mxu0
      %v2262 = vadd.f32 0.0, %v2261
      %v2263 = vpop.f32.mrf.mxu0
      %v2264 = vadd.f32 0.0, %v2263
      %2265 = vmatmul.bf16.gmra.mxu0 %v2193
      %v2266 = vpop.f32.mrf.mxu0
      %v2267 = vadd.f32 0.0, %v2266
      %v2268 = vpop.f32.mrf.mxu0
      %v2269 = vadd.f32 0.0, %v2268
      %2270 = vmatmul.bf16.gmra.mxu0 %v2194
      %v2271 = vpop.f32.mrf.mxu0
      %v2272 = vadd.f32 0.0, %v2271
      %v2273 = vpop.f32.mrf.mxu0
      %v2274 = vadd.f32 0.0, %v2273
      %2275 = vdwg.mxu0
      %v2276 = vadd.f32 %v2031, %v2257
      %v2277 = vadd.f32 %v2032, %v2259
      %v2278 = vadd.f32 %v2033, %v2262
      %v2279 = vadd.f32 %v2034, %v2264
      %v2280 = vadd.f32 %v2035, %v2267
      %v2281 = vadd.f32 %v2036, %v2269
      %v2282 = vadd.f32 %v2037, %v2272
      %v2283 = vadd.f32 %v2038, %v2274
      %v2284 = vld [vmem:[%s1905] sm:$0xe]
      %v2285 = vld [vmem:[%s1905 + $0x8] sm:$0xe]
      %v2286 = vld [vmem:[%s1905 + $0x10] sm:$0xe]
      %v2287 = vld [vmem:[%s1905 + $0x18] sm:$0xe]
      %v2288 = vld [vmem:[%s1905 + $0x20] sm:$0xe]
      %v2289 = vld [vmem:[%s1905 + $0x28] sm:$0xe]
      %v2290 = vld [vmem:[%s1905 + $0x30] sm:$0xe]
      %v2291 = vld [vmem:[%s1905 + $0x38] sm:$0xe]
      %v2308 = vrot.slane %v2284, 5
      %v2309 = vrot.slane %v2308, 4
      %v2310 = vrot.slane %v2040, 5
      %v2311 = vsel %vm1203, %v2309, %v2310
      %v2312 = vrot.slane %v2285, 5
      %v2313 = vrot.slane %v2312, 4
      %v2314 = vrot.slane %v2042, 5
      %v2315 = vsel %vm1203, %v2313, %v2314
      %v2316 = vrot.slane %v2286, 5
      %v2317 = vrot.slane %v2316, 4
      %v2318 = vrot.slane %v2044, 5
      %v2319 = vsel %vm1203, %v2317, %v2318
      %v2320 = vrot.slane %v2287, 5
      %v2321 = vrot.slane %v2320, 4
      %v2322 = vrot.slane %v2046, 5
      %v2323 = vsel %vm1203, %v2321, %v2322
      %v2324 = vrot.slane %v2288, 5
      %v2325 = vrot.slane %v2324, 4
      %v2326 = vrot.slane %v2048, 5
      %v2327 = vsel %vm1203, %v2325, %v2326
      %v2328 = vrot.slane %v2289, 5
      %v2329 = vrot.slane %v2328, 4
      %v2330 = vrot.slane %v2050, 5
      %v2331 = vsel %vm1203, %v2329, %v2330
      %v2332 = vrot.slane %v2290, 5
      %v2333 = vrot.slane %v2332, 4
      %v2334 = vrot.slane %v2052, 5
      %v2335 = vsel %vm1203, %v2333, %v2334
      %v2336 = vrot.slane %v2291, 5
      %v2337 = vrot.slane %v2336, 4
      %v2338 = vrot.slane %v2054, 5
      %v2339 = vsel %vm1203, %v2337, %v2338
      %v2340 = vld [vmem:[%s2 + $0x200] sm:$0xf]
      %v2341 = vld [vmem:[%s2 + $0x204] sm:$0xf]
      %v2342 = vld [vmem:[%s2 + $0x208] sm:$0xf]
      %v2343 = vld [vmem:[%s2 + $0x20c] sm:$0xf]
      %v2344 = vld [vmem:[%s2 + $0x210] sm:$0xf]
      %v2345 = vld [vmem:[%s2 + $0x214] sm:$0xf]
      %v2346 = vld [vmem:[%s2 + $0x218] sm:$0xf]
      %v2347 = vld [vmem:[%s2 + $0x21c] sm:$0xf]
      %v2348 = vld [vmem:[%s2 + $0x220] sm:$0xf]
      %v2349 = vld [vmem:[%s2 + $0x224] sm:$0xf]
      %v2350 = vld [vmem:[%s2 + $0x228] sm:$0xf]
      %v2351 = vld [vmem:[%s2 + $0x22c] sm:$0xf]
      %v2352 = vld [vmem:[%s2 + $0x230] sm:$0xf]
      %v2353 = vld [vmem:[%s2 + $0x234] sm:$0xf]
      %v2354 = vld [vmem:[%s2 + $0x238] sm:$0xf]
      %v2355 = vld [vmem:[%s2 + $0x23c] sm:$0xf]
      %v2356 = vunpack.c.l.b16 %v2311
      %v2357 = vunpack.c.l.b16 %v2315
      %v2358 = vunpack.c.l.b16 %v2319
      %v2359 = vunpack.c.l.b16 %v2323
      %v2360 = vunpack.c.l.b16 %v2327
      %v2361 = vunpack.c.l.b16 %v2331
      %v2362 = vunpack.c.l.b16 %v2335
      %v2363 = vunpack.c.l.b16 %v2339
      %v2364 = vpack.c.b16 %v2357, %v2356
      %v2365 = vpack.c.b16 %v2359, %v2358
      %v2366 = vpack.c.b16 %v2361, %v2360
      %v2367 = vpack.c.b16 %v2363, %v2362
      %v2388 = vunpack.c.l.b16 %v2340
      %v2389 = vunpack.c.l.b16 %v2341
      %v2390 = vunpack.c.l.b16 %v2342
      %v2391 = vunpack.c.l.b16 %v2343
      %v2392 = vunpack.c.l.b16 %v2344
      %v2393 = vunpack.c.l.b16 %v2345
      %v2394 = vunpack.c.l.b16 %v2346
      %v2395 = vunpack.c.l.b16 %v2347
      %v2396 = vunpack.c.l.b16 %v2348
      %v2397 = vunpack.c.l.b16 %v2349
      %v2398 = vunpack.c.l.b16 %v2350
      %v2399 = vunpack.c.l.b16 %v2351
      %v2400 = vunpack.c.l.b16 %v2352
      %v2401 = vunpack.c.l.b16 %v2353
      %v2402 = vunpack.c.l.b16 %v2354
      %v2403 = vunpack.c.l.b16 %v2355
      %v2404 = vpack.c.b16 %v2389, %v2388
      %v2405 = vpack.c.b16 %v2391, %v2390
      %v2406 = vpack.c.b16 %v2393, %v2392
      %v2407 = vpack.c.b16 %v2395, %v2394
      %v2408 = vpack.c.b16 %v2397, %v2396
      %v2409 = vpack.c.b16 %v2399, %v2398
      %v2410 = vpack.c.b16 %v2401, %v2400
      %v2411 = vpack.c.b16 %v2403, %v2402
      %2420 = vmatpush.bf16.msra.mxu0 %v2411
      %2421 = vmatpush.bf16.msra.mxu0 %v2410
      %2422 = vmatpush.bf16.msra.mxu0 %v2409
      %2423 = vmatpush.bf16.msra.mxu0 %v2408
      %2424 = vmatpush.bf16.msra.mxu0 %v2407
      %2425 = vmatpush.bf16.msra.mxu0 %v2406
      %2426 = vmatpush.bf16.msra.mxu0 %v2405
      %2427 = vmatpush.bf16.msra.mxu0 %v2404
      %2428 = vmatmul.bf16.gmra.mxu0 %v2364
      %v2429 = vpop.f32.mrf.mxu0
      %v2430 = vadd.f32 0.0, %v2429
      %v2431 = vpop.f32.mrf.mxu0
      %v2432 = vadd.f32 0.0, %v2431
      %2433 = vmatmul.bf16.gmra.mxu0 %v2365
      %v2434 = vpop.f32.mrf.mxu0
      %v2435 = vadd.f32 0.0, %v2434
      %v2436 = vpop.f32.mrf.mxu0
      %v2437 = vadd.f32 0.0, %v2436
      %2438 = vmatmul.bf16.gmra.mxu0 %v2366
      %v2439 = vpop.f32.mrf.mxu0
      %v2440 = vadd.f32 0.0, %v2439
      %v2441 = vpop.f32.mrf.mxu0
      %v2442 = vadd.f32 0.0, %v2441
      %2443 = vmatmul.bf16.gmra.mxu0 %v2367
      %v2444 = vpop.f32.mrf.mxu0
      %v2445 = vadd.f32 0.0, %v2444
      %v2446 = vpop.f32.mrf.mxu0
      %v2447 = vadd.f32 0.0, %v2446
      %2448 = vdwg.mxu0
      %v2449 = vadd.f32 %v2276, %v2430
      %v2450 = vadd.f32 %v2277, %v2432
      %v2451 = vadd.f32 %v2278, %v2435
      %v2452 = vadd.f32 %v2279, %v2437
      %v2453 = vadd.f32 %v2280, %v2440
      %v2454 = vadd.f32 %v2281, %v2442
      %v2455 = vadd.f32 %v2282, %v2445
      %v2456 = vadd.f32 %v2283, %v2447
      %v2457 = vld [vmem:[%s4] sm:$0x1]
      %v2459 = vperm.slane %v2457, 0
      %v2461 = vadd.f32 %v2449, %v2459
      %v2462 = vadd.f32 %v2450, %v2459
      %v2463 = vadd.f32 %v2451, %v2459
      %v2464 = vadd.f32 %v2452, %v2459
      %v2465 = vadd.f32 %v2453, %v2459
      %v2466 = vadd.f32 %v2454, %v2459
      %v2467 = vadd.f32 %v2455, %v2459
      %v2468 = vadd.f32 %v2456, %v2459
      %v2469 = vmax.f32 %v2461, 0.0
      %v2470 = vmax.f32 %v2462, 0.0
      %v2471 = vmax.f32 %v2463, 0.0
      %v2472 = vmax.f32 %v2464, 0.0
      %v2473 = vmax.f32 %v2465, 0.0
      %v2474 = vmax.f32 %v2466, 0.0
      %v2475 = vmax.f32 %v2467, 0.0
      %v2476 = vmax.f32 %v2468, 0.0
      %2477 = vst [vmem:[%s224] sm:$0xff] %v2469
      %2478 = vst [vmem:[%s224 + $0x8] sm:$0xff] %v2470
      %2479 = vst [vmem:[%s224 + $0x10] sm:$0xff] %v2471
      %2480 = vst [vmem:[%s224 + $0x18] sm:$0xff] %v2472
      %2481 = vst [vmem:[%s224 + $0x20] sm:$0xff] %v2473
      %2482 = vst [vmem:[%s224 + $0x28] sm:$0xff] %v2474
      %2483 = vst [vmem:[%s224 + $0x30] sm:$0xff] %v2475
      %2484 = vst [vmem:[%s224 + $0x38] sm:$0xff] %v2476
      %p2485 = scmp.lt.s32.totalorder %s16, 1
      %s2486 = scalar_select %p2485, %s16, 1
      %s2487 = smul.addr %s2486, 8
      %s2488 = smul.addr %s2487, 8
      %s2489 = scalar_lea.vmem %s5, %s2488
      // Predicated region
      $region41: #{pool_and_conv.1} parent=39 // pred_check
        %p2490 = pneg %p144
      $region42: #{pool_and_conv.1} parent=39 // pred_check_branch
        %2492 = sbr.rel (%p2490) target = $region44
      $region43: #{pool_and_conv.1} parent=39 // pred_region
        _
      $region44: #{pool_and_conv.1} parent=39 // pred_fallthru
        _
    $region40: #{pool_and_conv.1} parent=5 // pred_fallthru
      _
    %p2493 = scmp.le.s32.totalorder 2, %s11
    // Predicated region
    $region45: #{pool_and_conv.1} parent=5 // pred_check
      %p2494 = pneg %p2493
    $region46: #{pool_and_conv.1} parent=5 // pred_check_branch
      %2496 = sbr.rel (%p2494) target = $region48
    $region47: #{pool_and_conv.1} parent=5 // pred_region
      %s2497 = ssub.s32 %s11, 2
      // Predicated region
      $region49: #{pool_and_conv.1} parent=47 // pred_check
        %p2498 = pneg %p150
      $region50: #{pool_and_conv.1} parent=47 // pred_check_branch
        %2500 = sbr.rel (%p2498) target = $region52
      $region51: #{pool_and_conv.1} parent=47 // pred_region
        %p2501 = scmp.lt.s32.totalorder %s17, 1
        %s2502 = scalar_select %p2501, %s17, 1
        %s2503 = smul.addr %s2502, 8
        %s2504 = smul.addr %s2503, 8
        %s2505 = scalar_lea.vmem %s5, %s2504
      $region52: #{pool_and_conv.1} parent=47 // pred_fallthru
        _
    $region48: #{pool_and_conv.1} parent=5 // pred_fallthru
      _
  $region6: #{pool_and_conv.1} parent=0 // loop_footer
    %s15 = sadd.s32 1, %s11
  $region7: #{pool_and_conv.1} parent=0 // loop_footer_branch
    %10 = sbr.rel target = $region3
  $region8: #{pool_and_conv.1} parent=0 // loop_exit
    _

</llo_original>
